<compile_context>
chip_gen: v5e
topology: v5e:2x2
jax: 0.10.0
libtpu: 0.0.40
codegen_flags: <defaults>
</compile_context>

<pallas_src>
import math
import jax
import jax.numpy as jnp
from jax.experimental import pallas as pl
from jax.experimental.pallas import tpu as pltpu


def _round_up(n, m):
    return ((n + m - 1) // m) * m


def _dqn_kernel(x_ref, w1_ref, b1_ref, w2_ref, b2_ref, w3_ref, b3_ref, out_ref):
    # Natural layouts: x block (TB, S), output block (TB, A).  Each dot is the
    # standard "a @ w.T" contraction (rhs contracting dim = 1).
    def dot(a, w):
        return jax.lax.dot_general(
            a, w, (((1,), (1,)), ((), ())),
            precision=jax.lax.Precision.HIGHEST,
            preferred_element_type=jnp.float32)

    x = x_ref[...]                                               # (TB, S)
    h1 = jnp.maximum(dot(x, w1_ref[...]) + b1_ref[...], 0.0)     # (TB, 32)
    h2 = jnp.maximum(dot(h1, w2_ref[...]) + b2_ref[...], 0.0)    # (TB, 16)
    y = dot(h2, w3_ref[...]) + b3_ref[...]                       # (TB, A)
    out_ref[...] = y.astype(out_ref.dtype)


def _pick_tile_b(batch, tile_b, max_tile_b):
    """Pick a lane-aligned batch tile and the padded batch extent."""
    max_tile_b = _round_up(max(int(max_tile_b), 128), 128)
    b128 = _round_up(max(int(batch), 1), 128)
    if tile_b is None:
        if b128 >= 2048:
            # >=2 tiles so both v7x TensorCores get a batch tile; the extra
            # ~0.35us grid step is negligible at this size.
            tile_b = _round_up(pl.cdiv(b128, 2), 128)
        else:
            tile_b = b128
    tile_b = _round_up(max(int(tile_b), 128), 128)   # robust (8,128) tiling
    tile_b = min(tile_b, max_tile_b, b128)
    b_pad = _round_up(b128, tile_b)
    return tile_b, b_pad


def _vmem_limit_bytes(tile_b, S, A):
    """Scoped-VMEM request = lane-padded block footprint + headroom (capped so
    it stays comfortable on v7x's 64 MiB/TC while lifting v5e's 16 MiB default)."""
    lp = lambda n: _round_up(n, 128)
    sp = lambda n: _round_up(n, 8)
    blk = lambda r, c: sp(r) * lp(c) * 4
    fp = (2 * blk(tile_b, S)                 # x tile, double-buffered
          + 2 * blk(tile_b, A)               # out tile, double-buffered
          + blk(tile_b, 32) + blk(tile_b, 16)  # h1 / h2 intermediates
          + 2 * (blk(32, S) + blk(16, 32) + blk(A, 16)
                 + blk(1, 32) + blk(1, 16) + blk(1, A)))  # resident params
    return int(min(max(fp + (12 << 20), 16 << 20), 40 << 20))


def dqn_forward(x, params, *, tile_b=None, max_tile_b=8192):
    """DQN forward: x (B, state_size) -> (B, action_size).

    params: w1 (32,S), b1 (32,), w2 (16,32), b2 (16,), w3 (A,16), b3 (A,).
    Matches PyTorch: relu(l1(x)); relu(l2(.)); l3(.).
    """
    w1, b1 = params["w1"], params["b1"]
    w2, b2 = params["w2"], params["b2"]
    w3, b3 = params["w3"], params["b3"]
    B, S = x.shape
    A = w3.shape[0]

    tile_b, b_pad = _pick_tile_b(B, tile_b, max_tile_b)
    grid = (b_pad // tile_b,)
    if b_pad != B:
        # Zero rows compute relu(bias) garbage; sliced off below (intentional).
        x = jnp.pad(x, ((0, b_pad - B), (0, 0)))

    b1r, b2r, b3r = (b.reshape(1, -1) for b in (b1, b2, b3))
    const = lambda arr: pl.BlockSpec(arr.shape, lambda i: (0, 0))

    flops = 2 * b_pad * (S * 32 + 32 * 16 + 16 * A)
    bytes_accessed = 4 * (b_pad * (S + A) + w1.size + w2.size + w3.size
                          + b1.size + b2.size + b3.size)

    out = pl.pallas_call(
        _dqn_kernel,
        out_shape=jax.ShapeDtypeStruct((b_pad, A), jnp.float32),
        grid_spec=pltpu.PrefetchScalarGridSpec(
            num_scalar_prefetch=0,
            grid=grid,
            in_specs=[
                pl.BlockSpec((tile_b, S), lambda i: (i, 0)),  # x: streamed tiles
                const(w1), const(b1r),                        # params: resident
                const(w2), const(b2r),
                const(w3), const(b3r),
            ],
            out_specs=pl.BlockSpec((tile_b, A), lambda i: (i, 0)),
        ),
        compiler_params=pltpu.CompilerParams(
            dimension_semantics=("parallel",),   # batch tiles -> both TCs on v7x
            vmem_limit_bytes=_vmem_limit_bytes(tile_b, S, A),
        ),
        cost_estimate=pl.CostEstimate(
            flops=flops, transcendentals=0, bytes_accessed=bytes_accessed),
    )(x, w1, b1r, w2, b2r, w3, b3r)

    return out if b_pad == B else out[:B]


def init_dqn_params(key, state_size, action_size):
    """PyTorch nn.Linear default init: U(-1/sqrt(fan_in), 1/sqrt(fan_in)).
    Weights stored (out_features, in_features), biases (out_features,)."""
    dims = [(state_size, 32), (32, 16), (16, action_size)]
    params = {}
    for i, (fan_in, fan_out) in enumerate(dims, start=1):
        key, kw, kb = jax.random.split(key, 3)
        bound = 1.0 / math.sqrt(fan_in)
        params[f"w{i}"] = jax.random.uniform(
            kw, (fan_out, fan_in), jnp.float32, minval=-bound, maxval=bound)
        params[f"b{i}"] = jax.random.uniform(
            kb, (fan_out,), jnp.float32, minval=-bound, maxval=bound)
    return params


def dqn_reference(x, params):
    h1 = jnp.maximum(x @ params["w1"].T + params["b1"], 0.0)
    h2 = jnp.maximum(h1 @ params["w2"].T + params["b2"], 0.0)
    return h2 @ params["w3"].T + params["b3"]


if __name__ == "__main__":
    key = jax.random.PRNGKey(0)
    state_size, action_size = 8, 4
    kp, kx1, kx2, kx3 = jax.random.split(key, 4)
    params = init_dqn_params(kp, state_size, action_size)

    # Small batch: single 128-lane tile, exercises batch padding.
    x1 = jax.random.normal(kx1, (8, state_size), dtype=jnp.float32)
    o1 = jax.block_until_ready(dqn_forward(x1, params))
    r1 = dqn_reference(x1, params)
    assert o1.shape == (8, action_size)
    assert jnp.allclose(o1, r1, atol=1e-5, rtol=1e-5), "mismatch (small batch)"

    # Non-multiple batch with a non-128-multiple tile request: exercises tile
    # rounding + padding + a 3-step pipelined grid.
    x2 = jax.random.normal(kx2, (300, state_size), dtype=jnp.float32)
    o2 = jax.block_until_ready(dqn_forward(x2, params, tile_b=100))
    r2 = dqn_reference(x2, params)
    assert o2.shape == (300, action_size)
    assert jnp.allclose(o2, r2, atol=1e-5, rtol=1e-5), "mismatch (tiled batch)"

    # Larger batch: auto-picked >=2 parallel tiles (keeps both v7x TCs busy).
    x3 = jax.random.normal(kx3, (2304, state_size), dtype=jnp.float32)
    o3 = jax.block_until_ready(dqn_forward(x3, params))
    r3 = dqn_reference(x3, params)
    assert o3.shape == (2304, action_size)
    assert jnp.allclose(o3, r3, atol=1e-5, rtol=1e-5), "mismatch (large batch)"

    print("KERNEL_OK")
</pallas_src>

<mosaic_0001>
module attributes {stable_mosaic.version = 11 : i64} {
  func.func @_dqn_kernel(%arg0: i32, %arg1: memref<128x8xf32, #tpu.memory_space<vmem>>, %arg2: memref<32x8xf32, #tpu.memory_space<vmem>>, %arg3: memref<1x32xf32, #tpu.memory_space<vmem>>, %arg4: memref<16x32xf32, #tpu.memory_space<vmem>>, %arg5: memref<1x16xf32, #tpu.memory_space<vmem>>, %arg6: memref<4x16xf32, #tpu.memory_space<vmem>>, %arg7: memref<1x4xf32, #tpu.memory_space<vmem>>, %arg8: memref<128x4xf32, #tpu.memory_space<vmem>>) attributes {dimension_semantics = [#tpu.dimension_semantics<parallel>], iteration_bounds = array<i64: 1>, scalar_prefetch = 0 : i64, scratch_operands = 0 : i64, tpu.core_type = #tpu.core_type<tc>, window_params = [{transform_indices = @transform_0, window_bounds = array<i64: 128, 8>}, {pipeline_mode = #tpu.pipeline_mode<synchronous>, transform_indices = @transform_1, window_bounds = array<i64: 32, 8>}, {pipeline_mode = #tpu.pipeline_mode<synchronous>, transform_indices = @transform_2, window_bounds = array<i64: 1, 32>}, {pipeline_mode = #tpu.pipeline_mode<synchronous>, transform_indices = @transform_3, window_bounds = array<i64: 16, 32>}, {pipeline_mode = #tpu.pipeline_mode<synchronous>, transform_indices = @transform_4, window_bounds = array<i64: 1, 16>}, {pipeline_mode = #tpu.pipeline_mode<synchronous>, transform_indices = @transform_5, window_bounds = array<i64: 4, 16>}, {pipeline_mode = #tpu.pipeline_mode<synchronous>, transform_indices = @transform_6, window_bounds = array<i64: 1, 4>}, {transform_indices = @transform_7, window_bounds = array<i64: 128, 4>}]} {
    %c0 = arith.constant 0 : index
    %c0_0 = arith.constant 0 : index
    %0 = vector.load %arg1[%c0, %c0_0] : memref<128x8xf32, #tpu.memory_space<vmem>>, vector<128x8xf32>
    %c0_1 = arith.constant 0 : index
    %c0_2 = arith.constant 0 : index
    %1 = vector.load %arg2[%c0_1, %c0_2] : memref<32x8xf32, #tpu.memory_space<vmem>>, vector<32x8xf32>
    %cst = arith.constant dense<0.000000e+00> : vector<128x32xf32>
    %2 = tpu.matmul %0, %1, %cst {dimension_numbers = #tpu.dot_dimension_numbers<[1], [1], [0], [0], [0, 0, 1, 0], [], []>, precision = #tpu.contract_precision<fp32>} : vector<128x8xf32>, vector<32x8xf32>, vector<128x32xf32> -> vector<128x32xf32>
    %c0_3 = arith.constant 0 : index
    %c0_4 = arith.constant 0 : index
    %3 = vector.load %arg3[%c0_3, %c0_4] : memref<1x32xf32, #tpu.memory_space<vmem>>, vector<1x32xf32>
    %4 = vector.broadcast %3 : vector<1x32xf32> to vector<128x32xf32>
    %5 = arith.addf %2, %4 : vector<128x32xf32>
    %cst_5 = arith.constant 0.000000e+00 : f32
    %6 = vector.broadcast %cst_5 : f32 to vector<128x32xf32>
    %7 = arith.maximumf %5, %6 : vector<128x32xf32>
    %c0_6 = arith.constant 0 : index
    %c0_7 = arith.constant 0 : index
    %8 = vector.load %arg4[%c0_6, %c0_7] : memref<16x32xf32, #tpu.memory_space<vmem>>, vector<16x32xf32>
    %cst_8 = arith.constant dense<0.000000e+00> : vector<128x16xf32>
    %9 = tpu.matmul %7, %8, %cst_8 {dimension_numbers = #tpu.dot_dimension_numbers<[1], [1], [0], [0], [0, 0, 1, 0], [], []>, precision = #tpu.contract_precision<fp32>} : vector<128x32xf32>, vector<16x32xf32>, vector<128x16xf32> -> vector<128x16xf32>
    %c0_9 = arith.constant 0 : index
    %c0_10 = arith.constant 0 : index
    %10 = vector.load %arg5[%c0_9, %c0_10] : memref<1x16xf32, #tpu.memory_space<vmem>>, vector<1x16xf32>
    %11 = vector.broadcast %10 : vector<1x16xf32> to vector<128x16xf32>
    %12 = arith.addf %9, %11 : vector<128x16xf32>
    %cst_11 = arith.constant 0.000000e+00 : f32
    %13 = vector.broadcast %cst_11 : f32 to vector<128x16xf32>
    %14 = arith.maximumf %12, %13 : vector<128x16xf32>
    %c0_12 = arith.constant 0 : index
    %c0_13 = arith.constant 0 : index
    %15 = vector.load %arg6[%c0_12, %c0_13] : memref<4x16xf32, #tpu.memory_space<vmem>>, vector<4x16xf32>
    %cst_14 = arith.constant dense<0.000000e+00> : vector<128x4xf32>
    %16 = tpu.matmul %14, %15, %cst_14 {dimension_numbers = #tpu.dot_dimension_numbers<[1], [1], [0], [0], [0, 0, 1, 0], [], []>, precision = #tpu.contract_precision<fp32>} : vector<128x16xf32>, vector<4x16xf32>, vector<128x4xf32> -> vector<128x4xf32>
    %c0_15 = arith.constant 0 : index
    %c0_16 = arith.constant 0 : index
    %17 = vector.load %arg7[%c0_15, %c0_16] : memref<1x4xf32, #tpu.memory_space<vmem>>, vector<1x4xf32>
    %18 = vector.broadcast %17 : vector<1x4xf32> to vector<128x4xf32>
    %19 = arith.addf %16, %18 : vector<128x4xf32>
    %c0_17 = arith.constant 0 : index
    %c0_18 = arith.constant 0 : index
    %20 = vector.load %arg8[%c0_17, %c0_18] : memref<128x4xf32, #tpu.memory_space<vmem>>, vector<128x4xf32>
    tpu.vector_store %arg8[%c0_17, %c0_18], %19 {strides = array<i32>} : memref<128x4xf32, #tpu.memory_space<vmem>>, vector<128x4xf32>,
    return
  }
  func.func @transform_0(%arg0: i32) -> (i32, i32) {
    %c0_i32 = arith.constant 0 : i32
    %c0_i32_0 = arith.constant 0 : i32
    return %arg0, %c0_i32 : i32, i32
  }
  func.func @transform_1(%arg0: i32) -> (i32, i32) {
    %c0_i32 = arith.constant 0 : i32
    %c0_i32_0 = arith.constant 0 : i32
    %c0_i32_1 = arith.constant 0 : i32
    return %c0_i32, %c0_i32_0 : i32, i32
  }
  func.func @transform_2(%arg0: i32) -> (i32, i32) {
    %c0_i32 = arith.constant 0 : i32
    %c0_i32_0 = arith.constant 0 : i32
    %c0_i32_1 = arith.constant 0 : i32
    return %c0_i32, %c0_i32_0 : i32, i32
  }
  func.func @transform_3(%arg0: i32) -> (i32, i32) {
    %c0_i32 = arith.constant 0 : i32
    %c0_i32_0 = arith.constant 0 : i32
    %c0_i32_1 = arith.constant 0 : i32
    return %c0_i32, %c0_i32_0 : i32, i32
  }
  func.func @transform_4(%arg0: i32) -> (i32, i32) {
    %c0_i32 = arith.constant 0 : i32
    %c0_i32_0 = arith.constant 0 : i32
    %c0_i32_1 = arith.constant 0 : i32
    return %c0_i32, %c0_i32_0 : i32, i32
  }
  func.func @transform_5(%arg0: i32) -> (i32, i32) {
    %c0_i32 = arith.constant 0 : i32
    %c0_i32_0 = arith.constant 0 : i32
    %c0_i32_1 = arith.constant 0 : i32
    return %c0_i32, %c0_i32_0 : i32, i32
  }
  func.func @transform_6(%arg0: i32) -> (i32, i32) {
    %c0_i32 = arith.constant 0 : i32
    %c0_i32_0 = arith.constant 0 : i32
    %c0_i32_1 = arith.constant 0 : i32
    return %c0_i32, %c0_i32_0 : i32, i32
  }
  func.func @transform_7(%arg0: i32) -> (i32, i32) {
    %c0_i32 = arith.constant 0 : i32
    %c0_i32_0 = arith.constant 0 : i32
    return %arg0, %c0_i32 : i32, i32
  }
}

</mosaic_0001>

<llo_original>
// kernel: tpu_custom_call.1
$region0: #{tpu_custom_call.1}
  #allocation0 [shape = 'u32[]', space=smem, size = 0x4, offset = 0x4, fixed_abs, tag = 'smem constant byte address 0x4 - core index']
  #allocation1 [shape = 'u32[72,128]{1,0:T(1,128)}', space=vmem, size = 0x9000, scoped, tag = 'internal scratch']
  %s0 = inlined_call_operand.vmem [shape: f32[128,8], index: 0, kind: input, shape index: {}]
  %s1 = inlined_call_operand.vmem [shape: f32[32,8], index: 1, kind: input, shape index: {}]
  %s2 = inlined_call_operand.vmem [shape: f32[1,32], index: 2, kind: input, shape index: {}]
  %s3 = inlined_call_operand.vmem [shape: f32[16,32], index: 3, kind: input, shape index: {}]
  %s4 = inlined_call_operand.vmem [shape: f32[1,16], index: 4, kind: input, shape index: {}]
  %s5 = inlined_call_operand.vmem [shape: f32[4,16], index: 5, kind: input, shape index: {}]
  %s6 = inlined_call_operand.vmem [shape: f32[1,4], index: 6, kind: input, shape index: {}]
  %s7 = inlined_call_operand.vmem [shape: f32[128,4], index: 7, kind: output, shape index: {}]
  %s8 = sld [smem:[#allocation0]]
  $region38: #{tpu_custom_call.1} parent=0
    _
  %s10 = ssub.s32 1, %s8
  %s11 = scalar_select 0, %s10, %s8
  // Predicated region
  $region2: #{tpu_custom_call.1} parent=0 // pred_check
    _
  $region3: #{tpu_custom_call.1} parent=0 // pred_check_branch
    %13 = sbr.rel (0) target = $region5
  $region4: #{tpu_custom_call.1} parent=0 // pred_region
    _
  $region5: #{tpu_custom_call.1} parent=0 // pred_fallthru
    _
  // Predicated region
  $region6: #{tpu_custom_call.1} parent=0 // pred_check
    _
  $region7: #{tpu_custom_call.1} parent=0 // pred_check_branch
    %15 = sbr.rel (0) target = $region9
  $region8: #{tpu_custom_call.1} parent=0 // pred_region
    _
  $region9: #{tpu_custom_call.1} parent=0 // pred_fallthru
    _
  // Predicated region
  $region10: #{tpu_custom_call.1} parent=0 // pred_check
    _
  $region11: #{tpu_custom_call.1} parent=0 // pred_check_branch
    %17 = sbr.rel (0) target = $region13
  $region12: #{tpu_custom_call.1} parent=0 // pred_region
    _
  $region13: #{tpu_custom_call.1} parent=0 // pred_fallthru
    _
  // Predicated region
  $region14: #{tpu_custom_call.1} parent=0 // pred_check
    _
  $region15: #{tpu_custom_call.1} parent=0 // pred_check_branch
    %19 = sbr.rel (0) target = $region17
  $region16: #{tpu_custom_call.1} parent=0 // pred_region
    _
  $region17: #{tpu_custom_call.1} parent=0 // pred_fallthru
    _
  // Predicated region
  $region18: #{tpu_custom_call.1} parent=0 // pred_check
    _
  $region19: #{tpu_custom_call.1} parent=0 // pred_check_branch
    %21 = sbr.rel (0) target = $region21
  $region20: #{tpu_custom_call.1} parent=0 // pred_region
    _
  $region21: #{tpu_custom_call.1} parent=0 // pred_fallthru
    _
  // Predicated region
  $region22: #{tpu_custom_call.1} parent=0 // pred_check
    _
  $region23: #{tpu_custom_call.1} parent=0 // pred_check_branch
    %23 = sbr.rel (0) target = $region25
  $region24: #{tpu_custom_call.1} parent=0 // pred_region
    _
  $region25: #{tpu_custom_call.1} parent=0 // pred_fallthru
    _
  // Predicated region
  $region26: #{tpu_custom_call.1} parent=0 // pred_check
    _
  $region27: #{tpu_custom_call.1} parent=0 // pred_check_branch
    %25 = sbr.rel (0) target = $region29
  $region28: #{tpu_custom_call.1} parent=0 // pred_region
    _
  $region29: #{tpu_custom_call.1} parent=0 // pred_fallthru
    _
  %v26 = vld [vmem:[%s0] sm:$0xff]
  %v27 = vld [vmem:[%s0 + $0x8] sm:$0xff]
  %v28 = vld [vmem:[%s0 + $0x10] sm:$0xff]
  %v29 = vld [vmem:[%s0 + $0x18] sm:$0xff]
  %v30 = vld [vmem:[%s0 + $0x20] sm:$0xff]
  %v31 = vld [vmem:[%s0 + $0x28] sm:$0xff]
  %v32 = vld [vmem:[%s0 + $0x30] sm:$0xff]
  %v33 = vld [vmem:[%s0 + $0x38] sm:$0xff]
  %v34 = vld [vmem:[%s0 + $0x40] sm:$0xff]
  %v35 = vld [vmem:[%s0 + $0x48] sm:$0xff]
  %v36 = vld [vmem:[%s0 + $0x50] sm:$0xff]
  %v37 = vld [vmem:[%s0 + $0x58] sm:$0xff]
  %v38 = vld [vmem:[%s0 + $0x60] sm:$0xff]
  %v39 = vld [vmem:[%s0 + $0x68] sm:$0xff]
  %v40 = vld [vmem:[%s0 + $0x70] sm:$0xff]
  %v41 = vld [vmem:[%s0 + $0x78] sm:$0xff]
  %v42 = vld [vmem:[%s1] sm:$0xff]
  %v43 = vld [vmem:[%s1 + $0x8] sm:$0xff]
  %v44 = vld [vmem:[%s1 + $0x10] sm:$0xff]
  %v45 = vld [vmem:[%s1 + $0x18] sm:$0xff]
  %v46 = vld [vmem:[%s2] sm:$0x1]
  %v48 = vperm.slane %v46, 0
  %vm50 = vcmask 64512
  %v52 = vsel %vm50, %v26, 0
  %v55 = vsel %vm50, %v27, 0
  %v58 = vsel %vm50, %v28, 0
  %v61 = vsel %vm50, %v29, 0
  %v64 = vsel %vm50, %v30, 0
  %v67 = vsel %vm50, %v31, 0
  %v70 = vsel %vm50, %v32, 0
  %v73 = vsel %vm50, %v33, 0
  %v76 = vsel %vm50, %v34, 0
  %v79 = vsel %vm50, %v35, 0
  %v82 = vsel %vm50, %v36, 0
  %v85 = vsel %vm50, %v37, 0
  %v88 = vsel %vm50, %v38, 0
  %v91 = vsel %vm50, %v39, 0
  %v94 = vsel %vm50, %v40, 0
  %v97 = vsel %vm50, %v41, 0
  %v100 = vsel %vm50, %v42, 0
  %v103 = vsel %vm50, %v43, 0
  %v106 = vsel %vm50, %v44, 0
  %v109 = vsel %vm50, %v45, 0
  %111 = vmatpush.xpose.msra.mxu0 0.0
  %112 = vmatpush.xpose.msra.mxu0 0.0
  %113 = vmatpush.xpose.msra.mxu0 0.0
  %114 = vmatpush.xpose.msra.mxu0 0.0
  %115 = vmatpush.xpose.msra.mxu0 0.0
  %116 = vmatpush.xpose.msra.mxu0 0.0
  %117 = vmatpush.xpose.msra.mxu0 0.0
  %118 = vmatpush.xpose.msra.mxu0 0.0
  %119 = vmatpush.xpose.msra.mxu0 0.0
  %120 = vmatpush.xpose.msra.mxu0 0.0
  %121 = vmatpush.xpose.msra.mxu0 0.0
  %122 = vmatpush.xpose.msra.mxu0 0.0
  %v123 = vand.u32 %v109, 4294901760
  %124 = vmatpush.xpose.msra.mxu0 %v123
  %v125 = vand.u32 %v106, 4294901760
  %126 = vmatpush.xpose.msra.mxu0 %v125
  %v127 = vand.u32 %v103, 4294901760
  %128 = vmatpush.xpose.msra.mxu0 %v127
  %v129 = vand.u32 %v100, 4294901760
  %130 = vmatpush.xpose.msra.mxu0 %v129
  %v131 = vand.u32 %v52, 4294901760
  %v132 = vsub.f32 %v52, %v131
  %v133 = vand.u32 %v132, 4294901760
  %v134 = vsub.f32 %v132, %v133
  %v135 = vand.u32 %v134, 4294901760
  %136 = vmatmul.f32.gmra.mxu0 %v135
  %v137 = vpop.f32.mrf.mxu0
  %v138 = vadd.f32 %v48, %v137
  %v139 = vand.u32 %v55, 4294901760
  %v140 = vsub.f32 %v55, %v139
  %v141 = vand.u32 %v140, 4294901760
  %v142 = vsub.f32 %v140, %v141
  %v143 = vand.u32 %v142, 4294901760
  %144 = vmatmul.f32.gmra.mxu0 %v143
  %v145 = vpop.f32.mrf.mxu0
  %v146 = vadd.f32 %v48, %v145
  %v147 = vand.u32 %v58, 4294901760
  %v148 = vsub.f32 %v58, %v147
  %v149 = vand.u32 %v148, 4294901760
  %v150 = vsub.f32 %v148, %v149
  %v151 = vand.u32 %v150, 4294901760
  %152 = vmatmul.f32.gmra.mxu0 %v151
  %v153 = vpop.f32.mrf.mxu0
  %v154 = vadd.f32 %v48, %v153
  %v155 = vand.u32 %v61, 4294901760
  %v156 = vsub.f32 %v61, %v155
  %v157 = vand.u32 %v156, 4294901760
  %v158 = vsub.f32 %v156, %v157
  %v159 = vand.u32 %v158, 4294901760
  %160 = vmatmul.f32.gmra.mxu0 %v159
  %v161 = vpop.f32.mrf.mxu0
  %v162 = vadd.f32 %v48, %v161
  %v163 = vand.u32 %v64, 4294901760
  %v164 = vsub.f32 %v64, %v163
  %v165 = vand.u32 %v164, 4294901760
  %v166 = vsub.f32 %v164, %v165
  %v167 = vand.u32 %v166, 4294901760
  %168 = vmatmul.f32.gmra.mxu0 %v167
  %v169 = vpop.f32.mrf.mxu0
  %v170 = vadd.f32 %v48, %v169
  %v171 = vand.u32 %v67, 4294901760
  %v172 = vsub.f32 %v67, %v171
  %v173 = vand.u32 %v172, 4294901760
  %v174 = vsub.f32 %v172, %v173
  %v175 = vand.u32 %v174, 4294901760
  %176 = vmatmul.f32.gmra.mxu0 %v175
  %v177 = vpop.f32.mrf.mxu0
  %v178 = vadd.f32 %v48, %v177
  %v179 = vand.u32 %v70, 4294901760
  %v180 = vsub.f32 %v70, %v179
  %v181 = vand.u32 %v180, 4294901760
  %v182 = vsub.f32 %v180, %v181
  %v183 = vand.u32 %v182, 4294901760
  %184 = vmatmul.f32.gmra.mxu0 %v183
  %v185 = vpop.f32.mrf.mxu0
  %v186 = vadd.f32 %v48, %v185
  %v187 = vand.u32 %v73, 4294901760
  %v188 = vsub.f32 %v73, %v187
  %v189 = vand.u32 %v188, 4294901760
  %v190 = vsub.f32 %v188, %v189
  %v191 = vand.u32 %v190, 4294901760
  %192 = vmatmul.f32.gmra.mxu0 %v191
  %v193 = vpop.f32.mrf.mxu0
  %v194 = vadd.f32 %v48, %v193
  %v195 = vand.u32 %v76, 4294901760
  %v196 = vsub.f32 %v76, %v195
  %v197 = vand.u32 %v196, 4294901760
  %v198 = vsub.f32 %v196, %v197
  %v199 = vand.u32 %v198, 4294901760
  %200 = vmatmul.f32.gmra.mxu0 %v199
  %v201 = vpop.f32.mrf.mxu0
  %v202 = vadd.f32 %v48, %v201
  %v203 = vand.u32 %v79, 4294901760
  %v204 = vsub.f32 %v79, %v203
  %v205 = vand.u32 %v204, 4294901760
  %v206 = vsub.f32 %v204, %v205
  %v207 = vand.u32 %v206, 4294901760
  %208 = vmatmul.f32.gmra.mxu0 %v207
  %v209 = vpop.f32.mrf.mxu0
  %v210 = vadd.f32 %v48, %v209
  %v211 = vand.u32 %v82, 4294901760
  %v212 = vsub.f32 %v82, %v211
  %v213 = vand.u32 %v212, 4294901760
  %v214 = vsub.f32 %v212, %v213
  %v215 = vand.u32 %v214, 4294901760
  %216 = vmatmul.f32.gmra.mxu0 %v215
  %v217 = vpop.f32.mrf.mxu0
  %v218 = vadd.f32 %v48, %v217
  %v219 = vand.u32 %v85, 4294901760
  %v220 = vsub.f32 %v85, %v219
  %v221 = vand.u32 %v220, 4294901760
  %v222 = vsub.f32 %v220, %v221
  %v223 = vand.u32 %v222, 4294901760
  %224 = vmatmul.f32.gmra.mxu0 %v223
  %v225 = vpop.f32.mrf.mxu0
  %v226 = vadd.f32 %v48, %v225
  %v227 = vand.u32 %v88, 4294901760
  %v228 = vsub.f32 %v88, %v227
  %v229 = vand.u32 %v228, 4294901760
  %v230 = vsub.f32 %v228, %v229
  %v231 = vand.u32 %v230, 4294901760
  %232 = vmatmul.f32.gmra.mxu0 %v231
  %v233 = vpop.f32.mrf.mxu0
  %v234 = vadd.f32 %v48, %v233
  %v235 = vand.u32 %v91, 4294901760
  %v236 = vsub.f32 %v91, %v235
  %v237 = vand.u32 %v236, 4294901760
  %v238 = vsub.f32 %v236, %v237
  %v239 = vand.u32 %v238, 4294901760
  %240 = vmatmul.f32.gmra.mxu0 %v239
  %v241 = vpop.f32.mrf.mxu0
  %v242 = vadd.f32 %v48, %v241
  %v243 = vand.u32 %v94, 4294901760
  %v244 = vsub.f32 %v94, %v243
  %v245 = vand.u32 %v244, 4294901760
  %v246 = vsub.f32 %v244, %v245
  %v247 = vand.u32 %v246, 4294901760
  %248 = vmatmul.f32.gmra.mxu0 %v247
  %v249 = vpop.f32.mrf.mxu0
  %v250 = vadd.f32 %v48, %v249
  %v251 = vand.u32 %v97, 4294901760
  %v252 = vsub.f32 %v97, %v251
  %v253 = vand.u32 %v252, 4294901760
  %v254 = vsub.f32 %v252, %v253
  %v255 = vand.u32 %v254, 4294901760
  %256 = vmatmul.f32.gmra.mxu0 %v255
  %v257 = vpop.f32.mrf.mxu0
  %v258 = vadd.f32 %v48, %v257
  %259 = vdwg.mxu0
  %260 = vmatpush.xpose.msra.mxu0 0.0
  %261 = vmatpush.xpose.msra.mxu0 0.0
  %262 = vmatpush.xpose.msra.mxu0 0.0
  %263 = vmatpush.xpose.msra.mxu0 0.0
  %264 = vmatpush.xpose.msra.mxu0 0.0
  %265 = vmatpush.xpose.msra.mxu0 0.0
  %266 = vmatpush.xpose.msra.mxu0 0.0
  %267 = vmatpush.xpose.msra.mxu0 0.0
  %268 = vmatpush.xpose.msra.mxu0 0.0
  %269 = vmatpush.xpose.msra.mxu0 0.0
  %270 = vmatpush.xpose.msra.mxu0 0.0
  %271 = vmatpush.xpose.msra.mxu0 0.0
  %v272 = vand.u32 %v109, 4294901760
  %v273 = vsub.f32 %v109, %v272
  %v274 = vand.u32 %v273, 4294901760
  %v275 = vsub.f32 %v273, %v274
  %v276 = vand.u32 %v275, 4294901760
  %277 = vmatpush.xpose.msra.mxu0 %v276
  %v278 = vand.u32 %v106, 4294901760
  %v279 = vsub.f32 %v106, %v278
  %v280 = vand.u32 %v279, 4294901760
  %v281 = vsub.f32 %v279, %v280
  %v282 = vand.u32 %v281, 4294901760
  %283 = vmatpush.xpose.msra.mxu0 %v282
  %v284 = vand.u32 %v103, 4294901760
  %v285 = vsub.f32 %v103, %v284
  %v286 = vand.u32 %v285, 4294901760
  %v287 = vsub.f32 %v285, %v286
  %v288 = vand.u32 %v287, 4294901760
  %289 = vmatpush.xpose.msra.mxu0 %v288
  %v290 = vand.u32 %v100, 4294901760
  %v291 = vsub.f32 %v100, %v290
  %v292 = vand.u32 %v291, 4294901760
  %v293 = vsub.f32 %v291, %v292
  %v294 = vand.u32 %v293, 4294901760
  %295 = vmatpush.xpose.msra.mxu0 %v294
  %v296 = vand.u32 %v52, 4294901760
  %297 = vmatmul.f32.gmra.mxu0 %v296
  %v298 = vpop.f32.mrf.mxu0
  %v299 = vadd.f32 %v138, %v298
  %v300 = vand.u32 %v55, 4294901760
  %301 = vmatmul.f32.gmra.mxu0 %v300
  %v302 = vpop.f32.mrf.mxu0
  %v303 = vadd.f32 %v146, %v302
  %v304 = vand.u32 %v58, 4294901760
  %305 = vmatmul.f32.gmra.mxu0 %v304
  %v306 = vpop.f32.mrf.mxu0
  %v307 = vadd.f32 %v154, %v306
  %v308 = vand.u32 %v61, 4294901760
  %309 = vmatmul.f32.gmra.mxu0 %v308
  %v310 = vpop.f32.mrf.mxu0
  %v311 = vadd.f32 %v162, %v310
  %v312 = vand.u32 %v64, 4294901760
  %313 = vmatmul.f32.gmra.mxu0 %v312
  %v314 = vpop.f32.mrf.mxu0
  %v315 = vadd.f32 %v170, %v314
  %v316 = vand.u32 %v67, 4294901760
  %317 = vmatmul.f32.gmra.mxu0 %v316
  %v318 = vpop.f32.mrf.mxu0
  %v319 = vadd.f32 %v178, %v318
  %v320 = vand.u32 %v70, 4294901760
  %321 = vmatmul.f32.gmra.mxu0 %v320
  %v322 = vpop.f32.mrf.mxu0
  %v323 = vadd.f32 %v186, %v322
  %v324 = vand.u32 %v73, 4294901760
  %325 = vmatmul.f32.gmra.mxu0 %v324
  %v326 = vpop.f32.mrf.mxu0
  %v327 = vadd.f32 %v194, %v326
  %v328 = vand.u32 %v76, 4294901760
  %329 = vmatmul.f32.gmra.mxu0 %v328
  %v330 = vpop.f32.mrf.mxu0
  %v331 = vadd.f32 %v202, %v330
  %v332 = vand.u32 %v79, 4294901760
  %333 = vmatmul.f32.gmra.mxu0 %v332
  %v334 = vpop.f32.mrf.mxu0
  %v335 = vadd.f32 %v210, %v334
  %v336 = vand.u32 %v82, 4294901760
  %337 = vmatmul.f32.gmra.mxu0 %v336
  %v338 = vpop.f32.mrf.mxu0
  %v339 = vadd.f32 %v218, %v338
  %v340 = vand.u32 %v85, 4294901760
  %341 = vmatmul.f32.gmra.mxu0 %v340
  %v342 = vpop.f32.mrf.mxu0
  %v343 = vadd.f32 %v226, %v342
  %v344 = vand.u32 %v88, 4294901760
  %345 = vmatmul.f32.gmra.mxu0 %v344
  %v346 = vpop.f32.mrf.mxu0
  %v347 = vadd.f32 %v234, %v346
  %v348 = vand.u32 %v91, 4294901760
  %349 = vmatmul.f32.gmra.mxu0 %v348
  %v350 = vpop.f32.mrf.mxu0
  %v351 = vadd.f32 %v242, %v350
  %v352 = vand.u32 %v94, 4294901760
  %353 = vmatmul.f32.gmra.mxu0 %v352
  %v354 = vpop.f32.mrf.mxu0
  %v355 = vadd.f32 %v250, %v354
  %v356 = vand.u32 %v97, 4294901760
  %357 = vmatmul.f32.gmra.mxu0 %v356
  %v358 = vpop.f32.mrf.mxu0
  %v359 = vadd.f32 %v258, %v358
  %360 = vdwg.mxu0
  %361 = vmatpush.xpose.msra.mxu0 0.0
  %362 = vmatpush.xpose.msra.mxu0 0.0
  %363 = vmatpush.xpose.msra.mxu0 0.0
  %364 = vmatpush.xpose.msra.mxu0 0.0
  %365 = vmatpush.xpose.msra.mxu0 0.0
  %366 = vmatpush.xpose.msra.mxu0 0.0
  %367 = vmatpush.xpose.msra.mxu0 0.0
  %368 = vmatpush.xpose.msra.mxu0 0.0
  %369 = vmatpush.xpose.msra.mxu0 0.0
  %370 = vmatpush.xpose.msra.mxu0 0.0
  %371 = vmatpush.xpose.msra.mxu0 0.0
  %372 = vmatpush.xpose.msra.mxu0 0.0
  %v373 = vand.u32 %v109, 4294901760
  %v374 = vsub.f32 %v109, %v373
  %375 = vmatpush.xpose.msra.mxu0 %v374
  %v376 = vand.u32 %v106, 4294901760
  %v377 = vsub.f32 %v106, %v376
  %378 = vmatpush.xpose.msra.mxu0 %v377
  %v379 = vand.u32 %v103, 4294901760
  %v380 = vsub.f32 %v103, %v379
  %381 = vmatpush.xpose.msra.mxu0 %v380
  %v382 = vand.u32 %v100, 4294901760
  %v383 = vsub.f32 %v100, %v382
  %384 = vmatpush.xpose.msra.mxu0 %v383
  %v385 = vand.u32 %v52, 4294901760
  %v386 = vsub.f32 %v52, %v385
  %387 = vmatmul.f32.gmra.mxu0 %v386
  %v388 = vpop.f32.mrf.mxu0
  %v389 = vadd.f32 %v299, %v388
  %v390 = vand.u32 %v55, 4294901760
  %v391 = vsub.f32 %v55, %v390
  %392 = vmatmul.f32.gmra.mxu0 %v391
  %v393 = vpop.f32.mrf.mxu0
  %v394 = vadd.f32 %v303, %v393
  %v395 = vand.u32 %v58, 4294901760
  %v396 = vsub.f32 %v58, %v395
  %397 = vmatmul.f32.gmra.mxu0 %v396
  %v398 = vpop.f32.mrf.mxu0
  %v399 = vadd.f32 %v307, %v398
  %v400 = vand.u32 %v61, 4294901760
  %v401 = vsub.f32 %v61, %v400
  %402 = vmatmul.f32.gmra.mxu0 %v401
  %v403 = vpop.f32.mrf.mxu0
  %v404 = vadd.f32 %v311, %v403
  %v405 = vand.u32 %v64, 4294901760
  %v406 = vsub.f32 %v64, %v405
  %407 = vmatmul.f32.gmra.mxu0 %v406
  %v408 = vpop.f32.mrf.mxu0
  %v409 = vadd.f32 %v315, %v408
  %v410 = vand.u32 %v67, 4294901760
  %v411 = vsub.f32 %v67, %v410
  %412 = vmatmul.f32.gmra.mxu0 %v411
  %v413 = vpop.f32.mrf.mxu0
  %v414 = vadd.f32 %v319, %v413
  %v415 = vand.u32 %v70, 4294901760
  %v416 = vsub.f32 %v70, %v415
  %417 = vmatmul.f32.gmra.mxu0 %v416
  %v418 = vpop.f32.mrf.mxu0
  %v419 = vadd.f32 %v323, %v418
  %v420 = vand.u32 %v73, 4294901760
  %v421 = vsub.f32 %v73, %v420
  %422 = vmatmul.f32.gmra.mxu0 %v421
  %v423 = vpop.f32.mrf.mxu0
  %v424 = vadd.f32 %v327, %v423
  %v425 = vand.u32 %v76, 4294901760
  %v426 = vsub.f32 %v76, %v425
  %427 = vmatmul.f32.gmra.mxu0 %v426
  %v428 = vpop.f32.mrf.mxu0
  %v429 = vadd.f32 %v331, %v428
  %v430 = vand.u32 %v79, 4294901760
  %v431 = vsub.f32 %v79, %v430
  %432 = vmatmul.f32.gmra.mxu0 %v431
  %v433 = vpop.f32.mrf.mxu0
  %v434 = vadd.f32 %v335, %v433
  %v435 = vand.u32 %v82, 4294901760
  %v436 = vsub.f32 %v82, %v435
  %437 = vmatmul.f32.gmra.mxu0 %v436
  %v438 = vpop.f32.mrf.mxu0
  %v439 = vadd.f32 %v339, %v438
  %v440 = vand.u32 %v85, 4294901760
  %v441 = vsub.f32 %v85, %v440
  %442 = vmatmul.f32.gmra.mxu0 %v441
  %v443 = vpop.f32.mrf.mxu0
  %v444 = vadd.f32 %v343, %v443
  %v445 = vand.u32 %v88, 4294901760
  %v446 = vsub.f32 %v88, %v445
  %447 = vmatmul.f32.gmra.mxu0 %v446
  %v448 = vpop.f32.mrf.mxu0
  %v449 = vadd.f32 %v347, %v448
  %v450 = vand.u32 %v91, 4294901760
  %v451 = vsub.f32 %v91, %v450
  %452 = vmatmul.f32.gmra.mxu0 %v451
  %v453 = vpop.f32.mrf.mxu0
  %v454 = vadd.f32 %v351, %v453
  %v455 = vand.u32 %v94, 4294901760
  %v456 = vsub.f32 %v94, %v455
  %457 = vmatmul.f32.gmra.mxu0 %v456
  %v458 = vpop.f32.mrf.mxu0
  %v459 = vadd.f32 %v355, %v458
  %v460 = vand.u32 %v97, 4294901760
  %v461 = vsub.f32 %v97, %v460
  %462 = vmatmul.f32.gmra.mxu0 %v461
  %v463 = vpop.f32.mrf.mxu0
  %v464 = vadd.f32 %v359, %v463
  %465 = vdwg.mxu0
  %466 = vmatpush.xpose.msra.mxu0 0.0
  %467 = vmatpush.xpose.msra.mxu0 0.0
  %468 = vmatpush.xpose.msra.mxu0 0.0
  %469 = vmatpush.xpose.msra.mxu0 0.0
  %470 = vmatpush.xpose.msra.mxu0 0.0
  %471 = vmatpush.xpose.msra.mxu0 0.0
  %472 = vmatpush.xpose.msra.mxu0 0.0
  %473 = vmatpush.xpose.msra.mxu0 0.0
  %474 = vmatpush.xpose.msra.mxu0 0.0
  %475 = vmatpush.xpose.msra.mxu0 0.0
  %476 = vmatpush.xpose.msra.mxu0 0.0
  %477 = vmatpush.xpose.msra.mxu0 0.0
  %v478 = vand.u32 %v109, 4294901760
  %479 = vmatpush.xpose.msra.mxu0 %v478
  %v480 = vand.u32 %v106, 4294901760
  %481 = vmatpush.xpose.msra.mxu0 %v480
  %v482 = vand.u32 %v103, 4294901760
  %483 = vmatpush.xpose.msra.mxu0 %v482
  %v484 = vand.u32 %v100, 4294901760
  %485 = vmatpush.xpose.msra.mxu0 %v484
  %v486 = vand.u32 %v52, 4294901760
  %v487 = vsub.f32 %v52, %v486
  %v488 = vand.u32 %v487, 4294901760
  %489 = vmatmul.f32.gmra.mxu0 %v488
  %v490 = vpop.f32.mrf.mxu0
  %v491 = vadd.f32 %v389, %v490
  %v492 = vand.u32 %v55, 4294901760
  %v493 = vsub.f32 %v55, %v492
  %v494 = vand.u32 %v493, 4294901760
  %495 = vmatmul.f32.gmra.mxu0 %v494
  %v496 = vpop.f32.mrf.mxu0
  %v497 = vadd.f32 %v394, %v496
  %v498 = vand.u32 %v58, 4294901760
  %v499 = vsub.f32 %v58, %v498
  %v500 = vand.u32 %v499, 4294901760
  %501 = vmatmul.f32.gmra.mxu0 %v500
  %v502 = vpop.f32.mrf.mxu0
  %v503 = vadd.f32 %v399, %v502
  %v504 = vand.u32 %v61, 4294901760
  %v505 = vsub.f32 %v61, %v504
  %v506 = vand.u32 %v505, 4294901760
  %507 = vmatmul.f32.gmra.mxu0 %v506
  %v508 = vpop.f32.mrf.mxu0
  %v509 = vadd.f32 %v404, %v508
  %v510 = vand.u32 %v64, 4294901760
  %v511 = vsub.f32 %v64, %v510
  %v512 = vand.u32 %v511, 4294901760
  %513 = vmatmul.f32.gmra.mxu0 %v512
  %v514 = vpop.f32.mrf.mxu0
  %v515 = vadd.f32 %v409, %v514
  %v516 = vand.u32 %v67, 4294901760
  %v517 = vsub.f32 %v67, %v516
  %v518 = vand.u32 %v517, 4294901760
  %519 = vmatmul.f32.gmra.mxu0 %v518
  %v520 = vpop.f32.mrf.mxu0
  %v521 = vadd.f32 %v414, %v520
  %v522 = vand.u32 %v70, 4294901760
  %v523 = vsub.f32 %v70, %v522
  %v524 = vand.u32 %v523, 4294901760
  %525 = vmatmul.f32.gmra.mxu0 %v524
  %v526 = vpop.f32.mrf.mxu0
  %v527 = vadd.f32 %v419, %v526
  %v528 = vand.u32 %v73, 4294901760
  %v529 = vsub.f32 %v73, %v528
  %v530 = vand.u32 %v529, 4294901760
  %531 = vmatmul.f32.gmra.mxu0 %v530
  %v532 = vpop.f32.mrf.mxu0
  %v533 = vadd.f32 %v424, %v532
  %v534 = vand.u32 %v76, 4294901760
  %v535 = vsub.f32 %v76, %v534
  %v536 = vand.u32 %v535, 4294901760
  %537 = vmatmul.f32.gmra.mxu0 %v536
  %v538 = vpop.f32.mrf.mxu0
  %v539 = vadd.f32 %v429, %v538
  %v540 = vand.u32 %v79, 4294901760
  %v541 = vsub.f32 %v79, %v540
  %v542 = vand.u32 %v541, 4294901760
  %543 = vmatmul.f32.gmra.mxu0 %v542
  %v544 = vpop.f32.mrf.mxu0
  %v545 = vadd.f32 %v434, %v544
  %v546 = vand.u32 %v82, 4294901760
  %v547 = vsub.f32 %v82, %v546
  %v548 = vand.u32 %v547, 4294901760
  %549 = vmatmul.f32.gmra.mxu0 %v548
  %v550 = vpop.f32.mrf.mxu0
  %v551 = vadd.f32 %v439, %v550
  %v552 = vand.u32 %v85, 4294901760
  %v553 = vsub.f32 %v85, %v552
  %v554 = vand.u32 %v553, 4294901760
  %555 = vmatmul.f32.gmra.mxu0 %v554
  %v556 = vpop.f32.mrf.mxu0
  %v557 = vadd.f32 %v444, %v556
  %v558 = vand.u32 %v88, 4294901760
  %v559 = vsub.f32 %v88, %v558
  %v560 = vand.u32 %v559, 4294901760
  %561 = vmatmul.f32.gmra.mxu0 %v560
  %v562 = vpop.f32.mrf.mxu0
  %v563 = vadd.f32 %v449, %v562
  %v564 = vand.u32 %v91, 4294901760
  %v565 = vsub.f32 %v91, %v564
  %v566 = vand.u32 %v565, 4294901760
  %567 = vmatmul.f32.gmra.mxu0 %v566
  %v568 = vpop.f32.mrf.mxu0
  %v569 = vadd.f32 %v454, %v568
  %v570 = vand.u32 %v94, 4294901760
  %v571 = vsub.f32 %v94, %v570
  %v572 = vand.u32 %v571, 4294901760
  %573 = vmatmul.f32.gmra.mxu0 %v572
  %v574 = vpop.f32.mrf.mxu0
  %v575 = vadd.f32 %v459, %v574
  %v576 = vand.u32 %v97, 4294901760
  %v577 = vsub.f32 %v97, %v576
  %v578 = vand.u32 %v577, 4294901760
  %579 = vmatmul.f32.gmra.mxu0 %v578
  %v580 = vpop.f32.mrf.mxu0
  %v581 = vadd.f32 %v464, %v580
  %582 = vdwg.mxu0
  %583 = vmatpush.xpose.msra.mxu0 0.0
  %584 = vmatpush.xpose.msra.mxu0 0.0
  %585 = vmatpush.xpose.msra.mxu0 0.0
  %586 = vmatpush.xpose.msra.mxu0 0.0
  %587 = vmatpush.xpose.msra.mxu0 0.0
  %588 = vmatpush.xpose.msra.mxu0 0.0
  %589 = vmatpush.xpose.msra.mxu0 0.0
  %590 = vmatpush.xpose.msra.mxu0 0.0
  %591 = vmatpush.xpose.msra.mxu0 0.0
  %592 = vmatpush.xpose.msra.mxu0 0.0
  %593 = vmatpush.xpose.msra.mxu0 0.0
  %594 = vmatpush.xpose.msra.mxu0 0.0
  %v595 = vand.u32 %v109, 4294901760
  %v596 = vsub.f32 %v109, %v595
  %v597 = vand.u32 %v596, 4294901760
  %598 = vmatpush.xpose.msra.mxu0 %v597
  %v599 = vand.u32 %v106, 4294901760
  %v600 = vsub.f32 %v106, %v599
  %v601 = vand.u32 %v600, 4294901760
  %602 = vmatpush.xpose.msra.mxu0 %v601
  %v603 = vand.u32 %v103, 4294901760
  %v604 = vsub.f32 %v103, %v603
  %v605 = vand.u32 %v604, 4294901760
  %606 = vmatpush.xpose.msra.mxu0 %v605
  %v607 = vand.u32 %v100, 4294901760
  %v608 = vsub.f32 %v100, %v607
  %v609 = vand.u32 %v608, 4294901760
  %610 = vmatpush.xpose.msra.mxu0 %v609
  %v611 = vand.u32 %v52, 4294901760
  %612 = vmatmul.f32.gmra.mxu0 %v611
  %v613 = vpop.f32.mrf.mxu0
  %v614 = vadd.f32 %v491, %v613
  %v615 = vand.u32 %v55, 4294901760
  %616 = vmatmul.f32.gmra.mxu0 %v615
  %v617 = vpop.f32.mrf.mxu0
  %v618 = vadd.f32 %v497, %v617
  %v619 = vand.u32 %v58, 4294901760
  %620 = vmatmul.f32.gmra.mxu0 %v619
  %v621 = vpop.f32.mrf.mxu0
  %v622 = vadd.f32 %v503, %v621
  %v623 = vand.u32 %v61, 4294901760
  %624 = vmatmul.f32.gmra.mxu0 %v623
  %v625 = vpop.f32.mrf.mxu0
  %v626 = vadd.f32 %v509, %v625
  %v627 = vand.u32 %v64, 4294901760
  %628 = vmatmul.f32.gmra.mxu0 %v627
  %v629 = vpop.f32.mrf.mxu0
  %v630 = vadd.f32 %v515, %v629
  %v631 = vand.u32 %v67, 4294901760
  %632 = vmatmul.f32.gmra.mxu0 %v631
  %v633 = vpop.f32.mrf.mxu0
  %v634 = vadd.f32 %v521, %v633
  %v635 = vand.u32 %v70, 4294901760
  %636 = vmatmul.f32.gmra.mxu0 %v635
  %v637 = vpop.f32.mrf.mxu0
  %v638 = vadd.f32 %v527, %v637
  %v639 = vand.u32 %v73, 4294901760
  %640 = vmatmul.f32.gmra.mxu0 %v639
  %v641 = vpop.f32.mrf.mxu0
  %v642 = vadd.f32 %v533, %v641
  %v643 = vand.u32 %v76, 4294901760
  %644 = vmatmul.f32.gmra.mxu0 %v643
  %v645 = vpop.f32.mrf.mxu0
  %v646 = vadd.f32 %v539, %v645
  %v647 = vand.u32 %v79, 4294901760
  %648 = vmatmul.f32.gmra.mxu0 %v647
  %v649 = vpop.f32.mrf.mxu0
  %v650 = vadd.f32 %v545, %v649
  %v651 = vand.u32 %v82, 4294901760
  %652 = vmatmul.f32.gmra.mxu0 %v651
  %v653 = vpop.f32.mrf.mxu0
  %v654 = vadd.f32 %v551, %v653
  %v655 = vand.u32 %v85, 4294901760
  %656 = vmatmul.f32.gmra.mxu0 %v655
  %v657 = vpop.f32.mrf.mxu0
  %v658 = vadd.f32 %v557, %v657
  %v659 = vand.u32 %v88, 4294901760
  %660 = vmatmul.f32.gmra.mxu0 %v659
  %v661 = vpop.f32.mrf.mxu0
  %v662 = vadd.f32 %v563, %v661
  %v663 = vand.u32 %v91, 4294901760
  %664 = vmatmul.f32.gmra.mxu0 %v663
  %v665 = vpop.f32.mrf.mxu0
  %v666 = vadd.f32 %v569, %v665
  %v667 = vand.u32 %v94, 4294901760
  %668 = vmatmul.f32.gmra.mxu0 %v667
  %v669 = vpop.f32.mrf.mxu0
  %v670 = vadd.f32 %v575, %v669
  %v671 = vand.u32 %v97, 4294901760
  %672 = vmatmul.f32.gmra.mxu0 %v671
  %v673 = vpop.f32.mrf.mxu0
  %v674 = vadd.f32 %v581, %v673
  %675 = vdwg.mxu0
  %676 = vmatpush.xpose.msra.mxu0 0.0
  %677 = vmatpush.xpose.msra.mxu0 0.0
  %678 = vmatpush.xpose.msra.mxu0 0.0
  %679 = vmatpush.xpose.msra.mxu0 0.0
  %680 = vmatpush.xpose.msra.mxu0 0.0
  %681 = vmatpush.xpose.msra.mxu0 0.0
  %682 = vmatpush.xpose.msra.mxu0 0.0
  %683 = vmatpush.xpose.msra.mxu0 0.0
  %684 = vmatpush.xpose.msra.mxu0 0.0
  %685 = vmatpush.xpose.msra.mxu0 0.0
  %686 = vmatpush.xpose.msra.mxu0 0.0
  %687 = vmatpush.xpose.msra.mxu0 0.0
  %v688 = vand.u32 %v109, 4294901760
  %689 = vmatpush.xpose.msra.mxu0 %v688
  %v690 = vand.u32 %v106, 4294901760
  %691 = vmatpush.xpose.msra.mxu0 %v690
  %v692 = vand.u32 %v103, 4294901760
  %693 = vmatpush.xpose.msra.mxu0 %v692
  %v694 = vand.u32 %v100, 4294901760
  %695 = vmatpush.xpose.msra.mxu0 %v694
  %v696 = vand.u32 %v52, 4294901760
  %697 = vmatmul.f32.gmra.mxu0 %v696
  %v698 = vpop.f32.mrf.mxu0
  %v699 = vadd.f32 %v614, %v698
  %v700 = vand.u32 %v55, 4294901760
  %701 = vmatmul.f32.gmra.mxu0 %v700
  %v702 = vpop.f32.mrf.mxu0
  %v703 = vadd.f32 %v618, %v702
  %v704 = vand.u32 %v58, 4294901760
  %705 = vmatmul.f32.gmra.mxu0 %v704
  %v706 = vpop.f32.mrf.mxu0
  %v707 = vadd.f32 %v622, %v706
  %v708 = vand.u32 %v61, 4294901760
  %709 = vmatmul.f32.gmra.mxu0 %v708
  %v710 = vpop.f32.mrf.mxu0
  %v711 = vadd.f32 %v626, %v710
  %v712 = vand.u32 %v64, 4294901760
  %713 = vmatmul.f32.gmra.mxu0 %v712
  %v714 = vpop.f32.mrf.mxu0
  %v715 = vadd.f32 %v630, %v714
  %v716 = vand.u32 %v67, 4294901760
  %717 = vmatmul.f32.gmra.mxu0 %v716
  %v718 = vpop.f32.mrf.mxu0
  %v719 = vadd.f32 %v634, %v718
  %v720 = vand.u32 %v70, 4294901760
  %721 = vmatmul.f32.gmra.mxu0 %v720
  %v722 = vpop.f32.mrf.mxu0
  %v723 = vadd.f32 %v638, %v722
  %v724 = vand.u32 %v73, 4294901760
  %725 = vmatmul.f32.gmra.mxu0 %v724
  %v726 = vpop.f32.mrf.mxu0
  %v727 = vadd.f32 %v642, %v726
  %v728 = vand.u32 %v76, 4294901760
  %729 = vmatmul.f32.gmra.mxu0 %v728
  %v730 = vpop.f32.mrf.mxu0
  %v731 = vadd.f32 %v646, %v730
  %v732 = vand.u32 %v79, 4294901760
  %733 = vmatmul.f32.gmra.mxu0 %v732
  %v734 = vpop.f32.mrf.mxu0
  %v735 = vadd.f32 %v650, %v734
  %v736 = vand.u32 %v82, 4294901760
  %737 = vmatmul.f32.gmra.mxu0 %v736
  %v738 = vpop.f32.mrf.mxu0
  %v739 = vadd.f32 %v654, %v738
  %v740 = vand.u32 %v85, 4294901760
  %741 = vmatmul.f32.gmra.mxu0 %v740
  %v742 = vpop.f32.mrf.mxu0
  %v743 = vadd.f32 %v658, %v742
  %v744 = vand.u32 %v88, 4294901760
  %745 = vmatmul.f32.gmra.mxu0 %v744
  %v746 = vpop.f32.mrf.mxu0
  %v747 = vadd.f32 %v662, %v746
  %v748 = vand.u32 %v91, 4294901760
  %749 = vmatmul.f32.gmra.mxu0 %v748
  %v750 = vpop.f32.mrf.mxu0
  %v751 = vadd.f32 %v666, %v750
  %v752 = vand.u32 %v94, 4294901760
  %753 = vmatmul.f32.gmra.mxu0 %v752
  %v754 = vpop.f32.mrf.mxu0
  %v755 = vadd.f32 %v670, %v754
  %v756 = vand.u32 %v97, 4294901760
  %757 = vmatmul.f32.gmra.mxu0 %v756
  %v758 = vpop.f32.mrf.mxu0
  %v759 = vadd.f32 %v674, %v758
  %760 = vdwg.mxu0
  %v761 = vmax.f32 %v699, 0.0
  %v762 = vmax.f32 %v703, 0.0
  %v763 = vmax.f32 %v707, 0.0
  %v764 = vmax.f32 %v711, 0.0
  %v765 = vmax.f32 %v715, 0.0
  %v766 = vmax.f32 %v719, 0.0
  %v767 = vmax.f32 %v723, 0.0
  %v768 = vmax.f32 %v727, 0.0
  %v769 = vmax.f32 %v731, 0.0
  %v770 = vmax.f32 %v735, 0.0
  %v771 = vmax.f32 %v739, 0.0
  %v772 = vmax.f32 %v743, 0.0
  %v773 = vmax.f32 %v747, 0.0
  %v774 = vmax.f32 %v751, 0.0
  %v775 = vmax.f32 %v755, 0.0
  %v776 = vmax.f32 %v759, 0.0
  %v777 = vld [vmem:[%s3] sm:$0xff]
  %v778 = vld [vmem:[%s3 + $0x8] sm:$0xff]
  %v779 = vld [vmem:[%s4] sm:$0x1]
  %v781 = vperm.slane %v779, 0
  %vm783 = vcmask 261120
  %v785 = vsel %vm783, %v761, 0
  %v788 = vsel %vm783, %v762, 0
  %v791 = vsel %vm783, %v763, 0
  %v794 = vsel %vm783, %v764, 0
  %v797 = vsel %vm783, %v765, 0
  %v800 = vsel %vm783, %v766, 0
  %v803 = vsel %vm783, %v767, 0
  %v806 = vsel %vm783, %v768, 0
  %v809 = vsel %vm783, %v769, 0
  %v812 = vsel %vm783, %v770, 0
  %v815 = vsel %vm783, %v771, 0
  %v818 = vsel %vm783, %v772, 0
  %v821 = vsel %vm783, %v773, 0
  %v824 = vsel %vm783, %v774, 0
  %v827 = vsel %vm783, %v775, 0
  %v830 = vsel %vm783, %v776, 0
  %v833 = vsel %vm783, %v777, 0
  %v836 = vsel %vm783, %v778, 0
  %838 = vmatpush.xpose.msra.mxu0 0.0
  %839 = vmatpush.xpose.msra.mxu0 0.0
  %840 = vmatpush.xpose.msra.mxu0 0.0
  %841 = vmatpush.xpose.msra.mxu0 0.0
  %842 = vmatpush.xpose.msra.mxu0 0.0
  %843 = vmatpush.xpose.msra.mxu0 0.0
  %844 = vmatpush.xpose.msra.mxu0 0.0
  %845 = vmatpush.xpose.msra.mxu0 0.0
  %846 = vmatpush.xpose.msra.mxu0 0.0
  %847 = vmatpush.xpose.msra.mxu0 0.0
  %848 = vmatpush.xpose.msra.mxu0 0.0
  %849 = vmatpush.xpose.msra.mxu0 0.0
  %850 = vmatpush.xpose.msra.mxu0 0.0
  %851 = vmatpush.xpose.msra.mxu0 0.0
  %v852 = vand.u32 %v836, 4294901760
  %853 = vmatpush.xpose.msra.mxu0 %v852
  %v854 = vand.u32 %v833, 4294901760
  %855 = vmatpush.xpose.msra.mxu0 %v854
  %v856 = vand.u32 %v785, 4294901760
  %v857 = vsub.f32 %v785, %v856
  %v858 = vand.u32 %v857, 4294901760
  %v859 = vsub.f32 %v857, %v858
  %v860 = vand.u32 %v859, 4294901760
  %861 = vmatmul.f32.gmra.mxu0 %v860
  %v862 = vpop.f32.mrf.mxu0
  %v863 = vadd.f32 %v781, %v862
  %v864 = vand.u32 %v788, 4294901760
  %v865 = vsub.f32 %v788, %v864
  %v866 = vand.u32 %v865, 4294901760
  %v867 = vsub.f32 %v865, %v866
  %v868 = vand.u32 %v867, 4294901760
  %869 = vmatmul.f32.gmra.mxu0 %v868
  %v870 = vpop.f32.mrf.mxu0
  %v871 = vadd.f32 %v781, %v870
  %v872 = vand.u32 %v791, 4294901760
  %v873 = vsub.f32 %v791, %v872
  %v874 = vand.u32 %v873, 4294901760
  %v875 = vsub.f32 %v873, %v874
  %v876 = vand.u32 %v875, 4294901760
  %877 = vmatmul.f32.gmra.mxu0 %v876
  %v878 = vpop.f32.mrf.mxu0
  %v879 = vadd.f32 %v781, %v878
  %v880 = vand.u32 %v794, 4294901760
  %v881 = vsub.f32 %v794, %v880
  %v882 = vand.u32 %v881, 4294901760
  %v883 = vsub.f32 %v881, %v882
  %v884 = vand.u32 %v883, 4294901760
  %885 = vmatmul.f32.gmra.mxu0 %v884
  %v886 = vpop.f32.mrf.mxu0
  %v887 = vadd.f32 %v781, %v886
  %v888 = vand.u32 %v797, 4294901760
  %v889 = vsub.f32 %v797, %v888
  %v890 = vand.u32 %v889, 4294901760
  %v891 = vsub.f32 %v889, %v890
  %v892 = vand.u32 %v891, 4294901760
  %893 = vmatmul.f32.gmra.mxu0 %v892
  %v894 = vpop.f32.mrf.mxu0
  %v895 = vadd.f32 %v781, %v894
  %v896 = vand.u32 %v800, 4294901760
  %v897 = vsub.f32 %v800, %v896
  %v898 = vand.u32 %v897, 4294901760
  %v899 = vsub.f32 %v897, %v898
  %v900 = vand.u32 %v899, 4294901760
  %901 = vmatmul.f32.gmra.mxu0 %v900
  %v902 = vpop.f32.mrf.mxu0
  %v903 = vadd.f32 %v781, %v902
  %v904 = vand.u32 %v803, 4294901760
  %v905 = vsub.f32 %v803, %v904
  %v906 = vand.u32 %v905, 4294901760
  %v907 = vsub.f32 %v905, %v906
  %v908 = vand.u32 %v907, 4294901760
  %909 = vmatmul.f32.gmra.mxu0 %v908
  %v910 = vpop.f32.mrf.mxu0
  %v911 = vadd.f32 %v781, %v910
  %v912 = vand.u32 %v806, 4294901760
  %v913 = vsub.f32 %v806, %v912
  %v914 = vand.u32 %v913, 4294901760
  %v915 = vsub.f32 %v913, %v914
  %v916 = vand.u32 %v915, 4294901760
  %917 = vmatmul.f32.gmra.mxu0 %v916
  %v918 = vpop.f32.mrf.mxu0
  %v919 = vadd.f32 %v781, %v918
  %v920 = vand.u32 %v809, 4294901760
  %v921 = vsub.f32 %v809, %v920
  %v922 = vand.u32 %v921, 4294901760
  %v923 = vsub.f32 %v921, %v922
  %v924 = vand.u32 %v923, 4294901760
  %925 = vmatmul.f32.gmra.mxu0 %v924
  %v926 = vpop.f32.mrf.mxu0
  %v927 = vadd.f32 %v781, %v926
  %v928 = vand.u32 %v812, 4294901760
  %v929 = vsub.f32 %v812, %v928
  %v930 = vand.u32 %v929, 4294901760
  %v931 = vsub.f32 %v929, %v930
  %v932 = vand.u32 %v931, 4294901760
  %933 = vmatmul.f32.gmra.mxu0 %v932
  %v934 = vpop.f32.mrf.mxu0
  %v935 = vadd.f32 %v781, %v934
  %v936 = vand.u32 %v815, 4294901760
  %v937 = vsub.f32 %v815, %v936
  %v938 = vand.u32 %v937, 4294901760
  %v939 = vsub.f32 %v937, %v938
  %v940 = vand.u32 %v939, 4294901760
  %941 = vmatmul.f32.gmra.mxu0 %v940
  %v942 = vpop.f32.mrf.mxu0
  %v943 = vadd.f32 %v781, %v942
  %v944 = vand.u32 %v818, 4294901760
  %v945 = vsub.f32 %v818, %v944
  %v946 = vand.u32 %v945, 4294901760
  %v947 = vsub.f32 %v945, %v946
  %v948 = vand.u32 %v947, 4294901760
  %949 = vmatmul.f32.gmra.mxu0 %v948
  %v950 = vpop.f32.mrf.mxu0
  %v951 = vadd.f32 %v781, %v950
  %v952 = vand.u32 %v821, 4294901760
  %v953 = vsub.f32 %v821, %v952
  %v954 = vand.u32 %v953, 4294901760
  %v955 = vsub.f32 %v953, %v954
  %v956 = vand.u32 %v955, 4294901760
  %957 = vmatmul.f32.gmra.mxu0 %v956
  %v958 = vpop.f32.mrf.mxu0
  %v959 = vadd.f32 %v781, %v958
  %v960 = vand.u32 %v824, 4294901760
  %v961 = vsub.f32 %v824, %v960
  %v962 = vand.u32 %v961, 4294901760
  %v963 = vsub.f32 %v961, %v962
  %v964 = vand.u32 %v963, 4294901760
  %965 = vmatmul.f32.gmra.mxu0 %v964
  %v966 = vpop.f32.mrf.mxu0
  %v967 = vadd.f32 %v781, %v966
  %v968 = vand.u32 %v827, 4294901760
  %v969 = vsub.f32 %v827, %v968
  %v970 = vand.u32 %v969, 4294901760
  %v971 = vsub.f32 %v969, %v970
  %v972 = vand.u32 %v971, 4294901760
  %973 = vmatmul.f32.gmra.mxu0 %v972
  %v974 = vpop.f32.mrf.mxu0
  %v975 = vadd.f32 %v781, %v974
  %v976 = vand.u32 %v830, 4294901760
  %v977 = vsub.f32 %v830, %v976
  %v978 = vand.u32 %v977, 4294901760
  %v979 = vsub.f32 %v977, %v978
  %v980 = vand.u32 %v979, 4294901760
  %981 = vmatmul.f32.gmra.mxu0 %v980
  %v982 = vpop.f32.mrf.mxu0
  %v983 = vadd.f32 %v781, %v982
  %984 = vdwg.mxu0
  %985 = vmatpush.xpose.msra.mxu0 0.0
  %986 = vmatpush.xpose.msra.mxu0 0.0
  %987 = vmatpush.xpose.msra.mxu0 0.0
  %988 = vmatpush.xpose.msra.mxu0 0.0
  %989 = vmatpush.xpose.msra.mxu0 0.0
  %990 = vmatpush.xpose.msra.mxu0 0.0
  %991 = vmatpush.xpose.msra.mxu0 0.0
  %992 = vmatpush.xpose.msra.mxu0 0.0
  %993 = vmatpush.xpose.msra.mxu0 0.0
  %994 = vmatpush.xpose.msra.mxu0 0.0
  %995 = vmatpush.xpose.msra.mxu0 0.0
  %996 = vmatpush.xpose.msra.mxu0 0.0
  %997 = vmatpush.xpose.msra.mxu0 0.0
  %998 = vmatpush.xpose.msra.mxu0 0.0
  %v999 = vand.u32 %v836, 4294901760
  %v1000 = vsub.f32 %v836, %v999
  %v1001 = vand.u32 %v1000, 4294901760
  %v1002 = vsub.f32 %v1000, %v1001
  %v1003 = vand.u32 %v1002, 4294901760
  %1004 = vmatpush.xpose.msra.mxu0 %v1003
  %v1005 = vand.u32 %v833, 4294901760
  %v1006 = vsub.f32 %v833, %v1005
  %v1007 = vand.u32 %v1006, 4294901760
  %v1008 = vsub.f32 %v1006, %v1007
  %v1009 = vand.u32 %v1008, 4294901760
  %1010 = vmatpush.xpose.msra.mxu0 %v1009
  %v1011 = vand.u32 %v785, 4294901760
  %1012 = vmatmul.f32.gmra.mxu0 %v1011
  %v1013 = vpop.f32.mrf.mxu0
  %v1014 = vadd.f32 %v863, %v1013
  %v1015 = vand.u32 %v788, 4294901760
  %1016 = vmatmul.f32.gmra.mxu0 %v1015
  %v1017 = vpop.f32.mrf.mxu0
  %v1018 = vadd.f32 %v871, %v1017
  %v1019 = vand.u32 %v791, 4294901760
  %1020 = vmatmul.f32.gmra.mxu0 %v1019
  %v1021 = vpop.f32.mrf.mxu0
  %v1022 = vadd.f32 %v879, %v1021
  %v1023 = vand.u32 %v794, 4294901760
  %1024 = vmatmul.f32.gmra.mxu0 %v1023
  %v1025 = vpop.f32.mrf.mxu0
  %v1026 = vadd.f32 %v887, %v1025
  %v1027 = vand.u32 %v797, 4294901760
  %1028 = vmatmul.f32.gmra.mxu0 %v1027
  %v1029 = vpop.f32.mrf.mxu0
  %v1030 = vadd.f32 %v895, %v1029
  %v1031 = vand.u32 %v800, 4294901760
  %1032 = vmatmul.f32.gmra.mxu0 %v1031
  %v1033 = vpop.f32.mrf.mxu0
  %v1034 = vadd.f32 %v903, %v1033
  %v1035 = vand.u32 %v803, 4294901760
  %1036 = vmatmul.f32.gmra.mxu0 %v1035
  %v1037 = vpop.f32.mrf.mxu0
  %v1038 = vadd.f32 %v911, %v1037
  %v1039 = vand.u32 %v806, 4294901760
  %1040 = vmatmul.f32.gmra.mxu0 %v1039
  %v1041 = vpop.f32.mrf.mxu0
  %v1042 = vadd.f32 %v919, %v1041
  %v1043 = vand.u32 %v809, 4294901760
  %1044 = vmatmul.f32.gmra.mxu0 %v1043
  %v1045 = vpop.f32.mrf.mxu0
  %v1046 = vadd.f32 %v927, %v1045
  %v1047 = vand.u32 %v812, 4294901760
  %1048 = vmatmul.f32.gmra.mxu0 %v1047
  %v1049 = vpop.f32.mrf.mxu0
  %v1050 = vadd.f32 %v935, %v1049
  %v1051 = vand.u32 %v815, 4294901760
  %1052 = vmatmul.f32.gmra.mxu0 %v1051
  %v1053 = vpop.f32.mrf.mxu0
  %v1054 = vadd.f32 %v943, %v1053
  %v1055 = vand.u32 %v818, 4294901760
  %1056 = vmatmul.f32.gmra.mxu0 %v1055
  %v1057 = vpop.f32.mrf.mxu0
  %v1058 = vadd.f32 %v951, %v1057
  %v1059 = vand.u32 %v821, 4294901760
  %1060 = vmatmul.f32.gmra.mxu0 %v1059
  %v1061 = vpop.f32.mrf.mxu0
  %v1062 = vadd.f32 %v959, %v1061
  %v1063 = vand.u32 %v824, 4294901760
  %1064 = vmatmul.f32.gmra.mxu0 %v1063
  %v1065 = vpop.f32.mrf.mxu0
  %v1066 = vadd.f32 %v967, %v1065
  %v1067 = vand.u32 %v827, 4294901760
  %1068 = vmatmul.f32.gmra.mxu0 %v1067
  %v1069 = vpop.f32.mrf.mxu0
  %v1070 = vadd.f32 %v975, %v1069
  %v1071 = vand.u32 %v830, 4294901760
  %1072 = vmatmul.f32.gmra.mxu0 %v1071
  %v1073 = vpop.f32.mrf.mxu0
  %v1074 = vadd.f32 %v983, %v1073
  %1075 = vdwg.mxu0
  %1076 = vmatpush.xpose.msra.mxu0 0.0
  %1077 = vmatpush.xpose.msra.mxu0 0.0
  %1078 = vmatpush.xpose.msra.mxu0 0.0
  %1079 = vmatpush.xpose.msra.mxu0 0.0
  %1080 = vmatpush.xpose.msra.mxu0 0.0
  %1081 = vmatpush.xpose.msra.mxu0 0.0
  %1082 = vmatpush.xpose.msra.mxu0 0.0
  %1083 = vmatpush.xpose.msra.mxu0 0.0
  %1084 = vmatpush.xpose.msra.mxu0 0.0
  %1085 = vmatpush.xpose.msra.mxu0 0.0
  %1086 = vmatpush.xpose.msra.mxu0 0.0
  %1087 = vmatpush.xpose.msra.mxu0 0.0
  %1088 = vmatpush.xpose.msra.mxu0 0.0
  %1089 = vmatpush.xpose.msra.mxu0 0.0
  %v1090 = vand.u32 %v836, 4294901760
  %v1091 = vsub.f32 %v836, %v1090
  %1092 = vmatpush.xpose.msra.mxu0 %v1091
  %v1093 = vand.u32 %v833, 4294901760
  %v1094 = vsub.f32 %v833, %v1093
  %1095 = vmatpush.xpose.msra.mxu0 %v1094
  %v1096 = vand.u32 %v785, 4294901760
  %v1097 = vsub.f32 %v785, %v1096
  %1098 = vmatmul.f32.gmra.mxu0 %v1097
  %v1099 = vpop.f32.mrf.mxu0
  %v1100 = vadd.f32 %v1014, %v1099
  %v1101 = vand.u32 %v788, 4294901760
  %v1102 = vsub.f32 %v788, %v1101
  %1103 = vmatmul.f32.gmra.mxu0 %v1102
  %v1104 = vpop.f32.mrf.mxu0
  %v1105 = vadd.f32 %v1018, %v1104
  %v1106 = vand.u32 %v791, 4294901760
  %v1107 = vsub.f32 %v791, %v1106
  %1108 = vmatmul.f32.gmra.mxu0 %v1107
  %v1109 = vpop.f32.mrf.mxu0
  %v1110 = vadd.f32 %v1022, %v1109
  %v1111 = vand.u32 %v794, 4294901760
  %v1112 = vsub.f32 %v794, %v1111
  %1113 = vmatmul.f32.gmra.mxu0 %v1112
  %v1114 = vpop.f32.mrf.mxu0
  %v1115 = vadd.f32 %v1026, %v1114
  %v1116 = vand.u32 %v797, 4294901760
  %v1117 = vsub.f32 %v797, %v1116
  %1118 = vmatmul.f32.gmra.mxu0 %v1117
  %v1119 = vpop.f32.mrf.mxu0
  %v1120 = vadd.f32 %v1030, %v1119
  %v1121 = vand.u32 %v800, 4294901760
  %v1122 = vsub.f32 %v800, %v1121
  %1123 = vmatmul.f32.gmra.mxu0 %v1122
  %v1124 = vpop.f32.mrf.mxu0
  %v1125 = vadd.f32 %v1034, %v1124
  %v1126 = vand.u32 %v803, 4294901760
  %v1127 = vsub.f32 %v803, %v1126
  %1128 = vmatmul.f32.gmra.mxu0 %v1127
  %v1129 = vpop.f32.mrf.mxu0
  %v1130 = vadd.f32 %v1038, %v1129
  %v1131 = vand.u32 %v806, 4294901760
  %v1132 = vsub.f32 %v806, %v1131
  %1133 = vmatmul.f32.gmra.mxu0 %v1132
  %v1134 = vpop.f32.mrf.mxu0
  %v1135 = vadd.f32 %v1042, %v1134
  %v1136 = vand.u32 %v809, 4294901760
  %v1137 = vsub.f32 %v809, %v1136
  %1138 = vmatmul.f32.gmra.mxu0 %v1137
  %v1139 = vpop.f32.mrf.mxu0
  %v1140 = vadd.f32 %v1046, %v1139
  %v1141 = vand.u32 %v812, 4294901760
  %v1142 = vsub.f32 %v812, %v1141
  %1143 = vmatmul.f32.gmra.mxu0 %v1142
  %v1144 = vpop.f32.mrf.mxu0
  %v1145 = vadd.f32 %v1050, %v1144
  %v1146 = vand.u32 %v815, 4294901760
  %v1147 = vsub.f32 %v815, %v1146
  %1148 = vmatmul.f32.gmra.mxu0 %v1147
  %v1149 = vpop.f32.mrf.mxu0
  %v1150 = vadd.f32 %v1054, %v1149
  %v1151 = vand.u32 %v818, 4294901760
  %v1152 = vsub.f32 %v818, %v1151
  %1153 = vmatmul.f32.gmra.mxu0 %v1152
  %v1154 = vpop.f32.mrf.mxu0
  %v1155 = vadd.f32 %v1058, %v1154
  %v1156 = vand.u32 %v821, 4294901760
  %v1157 = vsub.f32 %v821, %v1156
  %1158 = vmatmul.f32.gmra.mxu0 %v1157
  %v1159 = vpop.f32.mrf.mxu0
  %v1160 = vadd.f32 %v1062, %v1159
  %v1161 = vand.u32 %v824, 4294901760
  %v1162 = vsub.f32 %v824, %v1161
  %1163 = vmatmul.f32.gmra.mxu0 %v1162
  %v1164 = vpop.f32.mrf.mxu0
  %v1165 = vadd.f32 %v1066, %v1164
  %v1166 = vand.u32 %v827, 4294901760
  %v1167 = vsub.f32 %v827, %v1166
  %1168 = vmatmul.f32.gmra.mxu0 %v1167
  %v1169 = vpop.f32.mrf.mxu0
  %v1170 = vadd.f32 %v1070, %v1169
  %v1171 = vand.u32 %v830, 4294901760
  %v1172 = vsub.f32 %v830, %v1171
  %1173 = vmatmul.f32.gmra.mxu0 %v1172
  %v1174 = vpop.f32.mrf.mxu0
  %v1175 = vadd.f32 %v1074, %v1174
  %1176 = vdwg.mxu0
  %1177 = vmatpush.xpose.msra.mxu0 0.0
  %1178 = vmatpush.xpose.msra.mxu0 0.0
  %1179 = vmatpush.xpose.msra.mxu0 0.0
  %1180 = vmatpush.xpose.msra.mxu0 0.0
  %1181 = vmatpush.xpose.msra.mxu0 0.0
  %1182 = vmatpush.xpose.msra.mxu0 0.0
  %1183 = vmatpush.xpose.msra.mxu0 0.0
  %1184 = vmatpush.xpose.msra.mxu0 0.0
  %1185 = vmatpush.xpose.msra.mxu0 0.0
  %1186 = vmatpush.xpose.msra.mxu0 0.0
  %1187 = vmatpush.xpose.msra.mxu0 0.0
  %1188 = vmatpush.xpose.msra.mxu0 0.0
  %1189 = vmatpush.xpose.msra.mxu0 0.0
  %1190 = vmatpush.xpose.msra.mxu0 0.0
  %v1191 = vand.u32 %v836, 4294901760
  %1192 = vmatpush.xpose.msra.mxu0 %v1191
  %v1193 = vand.u32 %v833, 4294901760
  %1194 = vmatpush.xpose.msra.mxu0 %v1193
  %v1195 = vand.u32 %v785, 4294901760
  %v1196 = vsub.f32 %v785, %v1195
  %v1197 = vand.u32 %v1196, 4294901760
  %1198 = vmatmul.f32.gmra.mxu0 %v1197
  %v1199 = vpop.f32.mrf.mxu0
  %v1200 = vadd.f32 %v1100, %v1199
  %v1201 = vand.u32 %v788, 4294901760
  %v1202 = vsub.f32 %v788, %v1201
  %v1203 = vand.u32 %v1202, 4294901760
  %1204 = vmatmul.f32.gmra.mxu0 %v1203
  %v1205 = vpop.f32.mrf.mxu0
  %v1206 = vadd.f32 %v1105, %v1205
  %v1207 = vand.u32 %v791, 4294901760
  %v1208 = vsub.f32 %v791, %v1207
  %v1209 = vand.u32 %v1208, 4294901760
  %1210 = vmatmul.f32.gmra.mxu0 %v1209
  %v1211 = vpop.f32.mrf.mxu0
  %v1212 = vadd.f32 %v1110, %v1211
  %v1213 = vand.u32 %v794, 4294901760
  %v1214 = vsub.f32 %v794, %v1213
  %v1215 = vand.u32 %v1214, 4294901760
  %1216 = vmatmul.f32.gmra.mxu0 %v1215
  %v1217 = vpop.f32.mrf.mxu0
  %v1218 = vadd.f32 %v1115, %v1217
  %v1219 = vand.u32 %v797, 4294901760
  %v1220 = vsub.f32 %v797, %v1219
  %v1221 = vand.u32 %v1220, 4294901760
  %1222 = vmatmul.f32.gmra.mxu0 %v1221
  %v1223 = vpop.f32.mrf.mxu0
  %v1224 = vadd.f32 %v1120, %v1223
  %v1225 = vand.u32 %v800, 4294901760
  %v1226 = vsub.f32 %v800, %v1225
  %v1227 = vand.u32 %v1226, 4294901760
  %1228 = vmatmul.f32.gmra.mxu0 %v1227
  %v1229 = vpop.f32.mrf.mxu0
  %v1230 = vadd.f32 %v1125, %v1229
  %v1231 = vand.u32 %v803, 4294901760
  %v1232 = vsub.f32 %v803, %v1231
  %v1233 = vand.u32 %v1232, 4294901760
  %1234 = vmatmul.f32.gmra.mxu0 %v1233
  %v1235 = vpop.f32.mrf.mxu0
  %v1236 = vadd.f32 %v1130, %v1235
  %v1237 = vand.u32 %v806, 4294901760
  %v1238 = vsub.f32 %v806, %v1237
  %v1239 = vand.u32 %v1238, 4294901760
  %1240 = vmatmul.f32.gmra.mxu0 %v1239
  %v1241 = vpop.f32.mrf.mxu0
  %v1242 = vadd.f32 %v1135, %v1241
  %v1243 = vand.u32 %v809, 4294901760
  %v1244 = vsub.f32 %v809, %v1243
  %v1245 = vand.u32 %v1244, 4294901760
  %1246 = vmatmul.f32.gmra.mxu0 %v1245
  %v1247 = vpop.f32.mrf.mxu0
  %v1248 = vadd.f32 %v1140, %v1247
  %v1249 = vand.u32 %v812, 4294901760
  %v1250 = vsub.f32 %v812, %v1249
  %v1251 = vand.u32 %v1250, 4294901760
  %1252 = vmatmul.f32.gmra.mxu0 %v1251
  %v1253 = vpop.f32.mrf.mxu0
  %v1254 = vadd.f32 %v1145, %v1253
  %v1255 = vand.u32 %v815, 4294901760
  %v1256 = vsub.f32 %v815, %v1255
  %v1257 = vand.u32 %v1256, 4294901760
  %1258 = vmatmul.f32.gmra.mxu0 %v1257
  %v1259 = vpop.f32.mrf.mxu0
  %v1260 = vadd.f32 %v1150, %v1259
  %v1261 = vand.u32 %v818, 4294901760
  %v1262 = vsub.f32 %v818, %v1261
  %v1263 = vand.u32 %v1262, 4294901760
  %1264 = vmatmul.f32.gmra.mxu0 %v1263
  %v1265 = vpop.f32.mrf.mxu0
  %v1266 = vadd.f32 %v1155, %v1265
  %v1267 = vand.u32 %v821, 4294901760
  %v1268 = vsub.f32 %v821, %v1267
  %v1269 = vand.u32 %v1268, 4294901760
  %1270 = vmatmul.f32.gmra.mxu0 %v1269
  %v1271 = vpop.f32.mrf.mxu0
  %v1272 = vadd.f32 %v1160, %v1271
  %v1273 = vand.u32 %v824, 4294901760
  %v1274 = vsub.f32 %v824, %v1273
  %v1275 = vand.u32 %v1274, 4294901760
  %1276 = vmatmul.f32.gmra.mxu0 %v1275
  %v1277 = vpop.f32.mrf.mxu0
  %v1278 = vadd.f32 %v1165, %v1277
  %v1279 = vand.u32 %v827, 4294901760
  %v1280 = vsub.f32 %v827, %v1279
  %v1281 = vand.u32 %v1280, 4294901760
  %1282 = vmatmul.f32.gmra.mxu0 %v1281
  %v1283 = vpop.f32.mrf.mxu0
  %v1284 = vadd.f32 %v1170, %v1283
  %v1285 = vand.u32 %v830, 4294901760
  %v1286 = vsub.f32 %v830, %v1285
  %v1287 = vand.u32 %v1286, 4294901760
  %1288 = vmatmul.f32.gmra.mxu0 %v1287
  %v1289 = vpop.f32.mrf.mxu0
  %v1290 = vadd.f32 %v1175, %v1289
  %1291 = vdwg.mxu0
  %1292 = vmatpush.xpose.msra.mxu0 0.0
  %1293 = vmatpush.xpose.msra.mxu0 0.0
  %1294 = vmatpush.xpose.msra.mxu0 0.0
  %1295 = vmatpush.xpose.msra.mxu0 0.0
  %1296 = vmatpush.xpose.msra.mxu0 0.0
  %1297 = vmatpush.xpose.msra.mxu0 0.0
  %1298 = vmatpush.xpose.msra.mxu0 0.0
  %1299 = vmatpush.xpose.msra.mxu0 0.0
  %1300 = vmatpush.xpose.msra.mxu0 0.0
  %1301 = vmatpush.xpose.msra.mxu0 0.0
  %1302 = vmatpush.xpose.msra.mxu0 0.0
  %1303 = vmatpush.xpose.msra.mxu0 0.0
  %1304 = vmatpush.xpose.msra.mxu0 0.0
  %1305 = vmatpush.xpose.msra.mxu0 0.0
  %v1306 = vand.u32 %v836, 4294901760
  %v1307 = vsub.f32 %v836, %v1306
  %v1308 = vand.u32 %v1307, 4294901760
  %1309 = vmatpush.xpose.msra.mxu0 %v1308
  %v1310 = vand.u32 %v833, 4294901760
  %v1311 = vsub.f32 %v833, %v1310
  %v1312 = vand.u32 %v1311, 4294901760
  %1313 = vmatpush.xpose.msra.mxu0 %v1312
  %v1314 = vand.u32 %v785, 4294901760
  %1315 = vmatmul.f32.gmra.mxu0 %v1314
  %v1316 = vpop.f32.mrf.mxu0
  %v1317 = vadd.f32 %v1200, %v1316
  %v1318 = vand.u32 %v788, 4294901760
  %1319 = vmatmul.f32.gmra.mxu0 %v1318
  %v1320 = vpop.f32.mrf.mxu0
  %v1321 = vadd.f32 %v1206, %v1320
  %v1322 = vand.u32 %v791, 4294901760
  %1323 = vmatmul.f32.gmra.mxu0 %v1322
  %v1324 = vpop.f32.mrf.mxu0
  %v1325 = vadd.f32 %v1212, %v1324
  %v1326 = vand.u32 %v794, 4294901760
  %1327 = vmatmul.f32.gmra.mxu0 %v1326
  %v1328 = vpop.f32.mrf.mxu0
  %v1329 = vadd.f32 %v1218, %v1328
  %v1330 = vand.u32 %v797, 4294901760
  %1331 = vmatmul.f32.gmra.mxu0 %v1330
  %v1332 = vpop.f32.mrf.mxu0
  %v1333 = vadd.f32 %v1224, %v1332
  %v1334 = vand.u32 %v800, 4294901760
  %1335 = vmatmul.f32.gmra.mxu0 %v1334
  %v1336 = vpop.f32.mrf.mxu0
  %v1337 = vadd.f32 %v1230, %v1336
  %v1338 = vand.u32 %v803, 4294901760
  %1339 = vmatmul.f32.gmra.mxu0 %v1338
  %v1340 = vpop.f32.mrf.mxu0
  %v1341 = vadd.f32 %v1236, %v1340
  %v1342 = vand.u32 %v806, 4294901760
  %1343 = vmatmul.f32.gmra.mxu0 %v1342
  %v1344 = vpop.f32.mrf.mxu0
  %v1345 = vadd.f32 %v1242, %v1344
  %v1346 = vand.u32 %v809, 4294901760
  %1347 = vmatmul.f32.gmra.mxu0 %v1346
  %v1348 = vpop.f32.mrf.mxu0
  %v1349 = vadd.f32 %v1248, %v1348
  %v1350 = vand.u32 %v812, 4294901760
  %1351 = vmatmul.f32.gmra.mxu0 %v1350
  %v1352 = vpop.f32.mrf.mxu0
  %v1353 = vadd.f32 %v1254, %v1352
  %v1354 = vand.u32 %v815, 4294901760
  %1355 = vmatmul.f32.gmra.mxu0 %v1354
  %v1356 = vpop.f32.mrf.mxu0
  %v1357 = vadd.f32 %v1260, %v1356
  %v1358 = vand.u32 %v818, 4294901760
  %1359 = vmatmul.f32.gmra.mxu0 %v1358
  %v1360 = vpop.f32.mrf.mxu0
  %v1361 = vadd.f32 %v1266, %v1360
  %v1362 = vand.u32 %v821, 4294901760
  %1363 = vmatmul.f32.gmra.mxu0 %v1362
  %v1364 = vpop.f32.mrf.mxu0
  %v1365 = vadd.f32 %v1272, %v1364
  %v1366 = vand.u32 %v824, 4294901760
  %1367 = vmatmul.f32.gmra.mxu0 %v1366
  %v1368 = vpop.f32.mrf.mxu0
  %v1369 = vadd.f32 %v1278, %v1368
  %v1370 = vand.u32 %v827, 4294901760
  %1371 = vmatmul.f32.gmra.mxu0 %v1370
  %v1372 = vpop.f32.mrf.mxu0
  %v1373 = vadd.f32 %v1284, %v1372
  %v1374 = vand.u32 %v830, 4294901760
  %1375 = vmatmul.f32.gmra.mxu0 %v1374
  %v1376 = vpop.f32.mrf.mxu0
  %v1377 = vadd.f32 %v1290, %v1376
  %1378 = vdwg.mxu0
  %1379 = vmatpush.xpose.msra.mxu0 0.0
  %1380 = vmatpush.xpose.msra.mxu0 0.0
  %1381 = vmatpush.xpose.msra.mxu0 0.0
  %1382 = vmatpush.xpose.msra.mxu0 0.0
  %1383 = vmatpush.xpose.msra.mxu0 0.0
  %1384 = vmatpush.xpose.msra.mxu0 0.0
  %1385 = vmatpush.xpose.msra.mxu0 0.0
  %1386 = vmatpush.xpose.msra.mxu0 0.0
  %1387 = vmatpush.xpose.msra.mxu0 0.0
  %1388 = vmatpush.xpose.msra.mxu0 0.0
  %1389 = vmatpush.xpose.msra.mxu0 0.0
  %1390 = vmatpush.xpose.msra.mxu0 0.0
  %1391 = vmatpush.xpose.msra.mxu0 0.0
  %1392 = vmatpush.xpose.msra.mxu0 0.0
  %v1393 = vand.u32 %v836, 4294901760
  %1394 = vmatpush.xpose.msra.mxu0 %v1393
  %v1395 = vand.u32 %v833, 4294901760
  %1396 = vmatpush.xpose.msra.mxu0 %v1395
  %v1397 = vand.u32 %v785, 4294901760
  %1398 = vmatmul.f32.gmra.mxu0 %v1397
  %v1399 = vpop.f32.mrf.mxu0
  %v1400 = vadd.f32 %v1317, %v1399
  %v1401 = vand.u32 %v788, 4294901760
  %1402 = vmatmul.f32.gmra.mxu0 %v1401
  %v1403 = vpop.f32.mrf.mxu0
  %v1404 = vadd.f32 %v1321, %v1403
  %v1405 = vand.u32 %v791, 4294901760
  %1406 = vmatmul.f32.gmra.mxu0 %v1405
  %v1407 = vpop.f32.mrf.mxu0
  %v1408 = vadd.f32 %v1325, %v1407
  %v1409 = vand.u32 %v794, 4294901760
  %1410 = vmatmul.f32.gmra.mxu0 %v1409
  %v1411 = vpop.f32.mrf.mxu0
  %v1412 = vadd.f32 %v1329, %v1411
  %v1413 = vand.u32 %v797, 4294901760
  %1414 = vmatmul.f32.gmra.mxu0 %v1413
  %v1415 = vpop.f32.mrf.mxu0
  %v1416 = vadd.f32 %v1333, %v1415
  %v1417 = vand.u32 %v800, 4294901760
  %1418 = vmatmul.f32.gmra.mxu0 %v1417
  %v1419 = vpop.f32.mrf.mxu0
  %v1420 = vadd.f32 %v1337, %v1419
  %v1421 = vand.u32 %v803, 4294901760
  %1422 = vmatmul.f32.gmra.mxu0 %v1421
  %v1423 = vpop.f32.mrf.mxu0
  %v1424 = vadd.f32 %v1341, %v1423
  %v1425 = vand.u32 %v806, 4294901760
  %1426 = vmatmul.f32.gmra.mxu0 %v1425
  %v1427 = vpop.f32.mrf.mxu0
  %v1428 = vadd.f32 %v1345, %v1427
  %v1429 = vand.u32 %v809, 4294901760
  %1430 = vmatmul.f32.gmra.mxu0 %v1429
  %v1431 = vpop.f32.mrf.mxu0
  %v1432 = vadd.f32 %v1349, %v1431
  %v1433 = vand.u32 %v812, 4294901760
  %1434 = vmatmul.f32.gmra.mxu0 %v1433
  %v1435 = vpop.f32.mrf.mxu0
  %v1436 = vadd.f32 %v1353, %v1435
  %v1437 = vand.u32 %v815, 4294901760
  %1438 = vmatmul.f32.gmra.mxu0 %v1437
  %v1439 = vpop.f32.mrf.mxu0
  %v1440 = vadd.f32 %v1357, %v1439
  %v1441 = vand.u32 %v818, 4294901760
  %1442 = vmatmul.f32.gmra.mxu0 %v1441
  %v1443 = vpop.f32.mrf.mxu0
  %v1444 = vadd.f32 %v1361, %v1443
  %v1445 = vand.u32 %v821, 4294901760
  %1446 = vmatmul.f32.gmra.mxu0 %v1445
  %v1447 = vpop.f32.mrf.mxu0
  %v1448 = vadd.f32 %v1365, %v1447
  %v1449 = vand.u32 %v824, 4294901760
  %1450 = vmatmul.f32.gmra.mxu0 %v1449
  %v1451 = vpop.f32.mrf.mxu0
  %v1452 = vadd.f32 %v1369, %v1451
  %v1453 = vand.u32 %v827, 4294901760
  %1454 = vmatmul.f32.gmra.mxu0 %v1453
  %v1455 = vpop.f32.mrf.mxu0
  %v1456 = vadd.f32 %v1373, %v1455
  %v1457 = vand.u32 %v830, 4294901760
  %1458 = vmatmul.f32.gmra.mxu0 %v1457
  %v1459 = vpop.f32.mrf.mxu0
  %v1460 = vadd.f32 %v1377, %v1459
  %1461 = vdwg.mxu0
  %v1462 = vmax.f32 %v1400, 0.0
  %v1463 = vmax.f32 %v1404, 0.0
  %v1464 = vmax.f32 %v1408, 0.0
  %v1465 = vmax.f32 %v1412, 0.0
  %v1466 = vmax.f32 %v1416, 0.0
  %v1467 = vmax.f32 %v1420, 0.0
  %v1468 = vmax.f32 %v1424, 0.0
  %v1469 = vmax.f32 %v1428, 0.0
  %v1470 = vmax.f32 %v1432, 0.0
  %v1471 = vmax.f32 %v1436, 0.0
  %v1472 = vmax.f32 %v1440, 0.0
  %v1473 = vmax.f32 %v1444, 0.0
  %v1474 = vmax.f32 %v1448, 0.0
  %v1475 = vmax.f32 %v1452, 0.0
  %v1476 = vmax.f32 %v1456, 0.0
  %v1477 = vmax.f32 %v1460, 0.0
  %v1478 = vld [vmem:[%s5] sm:$0xf]
  %v1479 = vld [vmem:[%s6] sm:$0x1]
  %v1481 = vperm.slane %v1479, 0
  %vm1483 = vcmask 130048
  %v1485 = vsel %vm1483, %v1462, 0
  %v1488 = vsel %vm1483, %v1463, 0
  %v1491 = vsel %vm1483, %v1464, 0
  %v1494 = vsel %vm1483, %v1465, 0
  %v1497 = vsel %vm1483, %v1466, 0
  %v1500 = vsel %vm1483, %v1467, 0
  %v1503 = vsel %vm1483, %v1468, 0
  %v1506 = vsel %vm1483, %v1469, 0
  %v1509 = vsel %vm1483, %v1470, 0
  %v1512 = vsel %vm1483, %v1471, 0
  %v1515 = vsel %vm1483, %v1472, 0
  %v1518 = vsel %vm1483, %v1473, 0
  %v1521 = vsel %vm1483, %v1474, 0
  %v1524 = vsel %vm1483, %v1475, 0
  %v1527 = vsel %vm1483, %v1476, 0
  %v1530 = vsel %vm1483, %v1477, 0
  %v1533 = vsel %vm1483, %v1478, 0
  %1535 = vmatpush.xpose.msra.mxu0 0.0
  %1536 = vmatpush.xpose.msra.mxu0 0.0
  %1537 = vmatpush.xpose.msra.mxu0 0.0
  %1538 = vmatpush.xpose.msra.mxu0 0.0
  %1539 = vmatpush.xpose.msra.mxu0 0.0
  %1540 = vmatpush.xpose.msra.mxu0 0.0
  %1541 = vmatpush.xpose.msra.mxu0 0.0
  %1542 = vmatpush.xpose.msra.mxu0 0.0
  %1543 = vmatpush.xpose.msra.mxu0 0.0
  %1544 = vmatpush.xpose.msra.mxu0 0.0
  %1545 = vmatpush.xpose.msra.mxu0 0.0
  %1546 = vmatpush.xpose.msra.mxu0 0.0
  %1547 = vmatpush.xpose.msra.mxu0 0.0
  %1548 = vmatpush.xpose.msra.mxu0 0.0
  %1549 = vmatpush.xpose.msra.mxu0 0.0
  %v1550 = vand.u32 %v1533, 4294901760
  %1551 = vmatpush.xpose.msra.mxu0 %v1550
  %v1552 = vand.u32 %v1485, 4294901760
  %v1553 = vsub.f32 %v1485, %v1552
  %v1554 = vand.u32 %v1553, 4294901760
  %v1555 = vsub.f32 %v1553, %v1554
  %v1556 = vand.u32 %v1555, 4294901760
  %1557 = vmatmul.f32.gmra.mxu0 %v1556
  %v1558 = vpop.f32.mrf.mxu0
  %v1559 = vadd.f32 %v1481, %v1558
  %v1560 = vand.u32 %v1488, 4294901760
  %v1561 = vsub.f32 %v1488, %v1560
  %v1562 = vand.u32 %v1561, 4294901760
  %v1563 = vsub.f32 %v1561, %v1562
  %v1564 = vand.u32 %v1563, 4294901760
  %1565 = vmatmul.f32.gmra.mxu0 %v1564
  %v1566 = vpop.f32.mrf.mxu0
  %v1567 = vadd.f32 %v1481, %v1566
  %v1568 = vand.u32 %v1491, 4294901760
  %v1569 = vsub.f32 %v1491, %v1568
  %v1570 = vand.u32 %v1569, 4294901760
  %v1571 = vsub.f32 %v1569, %v1570
  %v1572 = vand.u32 %v1571, 4294901760
  %1573 = vmatmul.f32.gmra.mxu0 %v1572
  %v1574 = vpop.f32.mrf.mxu0
  %v1575 = vadd.f32 %v1481, %v1574
  %v1576 = vand.u32 %v1494, 4294901760
  %v1577 = vsub.f32 %v1494, %v1576
  %v1578 = vand.u32 %v1577, 4294901760
  %v1579 = vsub.f32 %v1577, %v1578
  %v1580 = vand.u32 %v1579, 4294901760
  %1581 = vmatmul.f32.gmra.mxu0 %v1580
  %v1582 = vpop.f32.mrf.mxu0
  %v1583 = vadd.f32 %v1481, %v1582
  %v1584 = vand.u32 %v1497, 4294901760
  %v1585 = vsub.f32 %v1497, %v1584
  %v1586 = vand.u32 %v1585, 4294901760
  %v1587 = vsub.f32 %v1585, %v1586
  %v1588 = vand.u32 %v1587, 4294901760
  %1589 = vmatmul.f32.gmra.mxu0 %v1588
  %v1590 = vpop.f32.mrf.mxu0
  %v1591 = vadd.f32 %v1481, %v1590
  %v1592 = vand.u32 %v1500, 4294901760
  %v1593 = vsub.f32 %v1500, %v1592
  %v1594 = vand.u32 %v1593, 4294901760
  %v1595 = vsub.f32 %v1593, %v1594
  %v1596 = vand.u32 %v1595, 4294901760
  %1597 = vmatmul.f32.gmra.mxu0 %v1596
  %v1598 = vpop.f32.mrf.mxu0
  %v1599 = vadd.f32 %v1481, %v1598
  %v1600 = vand.u32 %v1503, 4294901760
  %v1601 = vsub.f32 %v1503, %v1600
  %v1602 = vand.u32 %v1601, 4294901760
  %v1603 = vsub.f32 %v1601, %v1602
  %v1604 = vand.u32 %v1603, 4294901760
  %1605 = vmatmul.f32.gmra.mxu0 %v1604
  %v1606 = vpop.f32.mrf.mxu0
  %v1607 = vadd.f32 %v1481, %v1606
  %v1608 = vand.u32 %v1506, 4294901760
  %v1609 = vsub.f32 %v1506, %v1608
  %v1610 = vand.u32 %v1609, 4294901760
  %v1611 = vsub.f32 %v1609, %v1610
  %v1612 = vand.u32 %v1611, 4294901760
  %1613 = vmatmul.f32.gmra.mxu0 %v1612
  %v1614 = vpop.f32.mrf.mxu0
  %v1615 = vadd.f32 %v1481, %v1614
  %v1616 = vand.u32 %v1509, 4294901760
  %v1617 = vsub.f32 %v1509, %v1616
  %v1618 = vand.u32 %v1617, 4294901760
  %v1619 = vsub.f32 %v1617, %v1618
  %v1620 = vand.u32 %v1619, 4294901760
  %1621 = vmatmul.f32.gmra.mxu0 %v1620
  %v1622 = vpop.f32.mrf.mxu0
  %v1623 = vadd.f32 %v1481, %v1622
  %v1624 = vand.u32 %v1512, 4294901760
  %v1625 = vsub.f32 %v1512, %v1624
  %v1626 = vand.u32 %v1625, 4294901760
  %v1627 = vsub.f32 %v1625, %v1626
  %v1628 = vand.u32 %v1627, 4294901760
  %1629 = vmatmul.f32.gmra.mxu0 %v1628
  %v1630 = vpop.f32.mrf.mxu0
  %v1631 = vadd.f32 %v1481, %v1630
  %v1632 = vand.u32 %v1515, 4294901760
  %v1633 = vsub.f32 %v1515, %v1632
  %v1634 = vand.u32 %v1633, 4294901760
  %v1635 = vsub.f32 %v1633, %v1634
  %v1636 = vand.u32 %v1635, 4294901760
  %1637 = vmatmul.f32.gmra.mxu0 %v1636
  %v1638 = vpop.f32.mrf.mxu0
  %v1639 = vadd.f32 %v1481, %v1638
  %v1640 = vand.u32 %v1518, 4294901760
  %v1641 = vsub.f32 %v1518, %v1640
  %v1642 = vand.u32 %v1641, 4294901760
  %v1643 = vsub.f32 %v1641, %v1642
  %v1644 = vand.u32 %v1643, 4294901760
  %1645 = vmatmul.f32.gmra.mxu0 %v1644
  %v1646 = vpop.f32.mrf.mxu0
  %v1647 = vadd.f32 %v1481, %v1646
  %v1648 = vand.u32 %v1521, 4294901760
  %v1649 = vsub.f32 %v1521, %v1648
  %v1650 = vand.u32 %v1649, 4294901760
  %v1651 = vsub.f32 %v1649, %v1650
  %v1652 = vand.u32 %v1651, 4294901760
  %1653 = vmatmul.f32.gmra.mxu0 %v1652
  %v1654 = vpop.f32.mrf.mxu0
  %v1655 = vadd.f32 %v1481, %v1654
  %v1656 = vand.u32 %v1524, 4294901760
  %v1657 = vsub.f32 %v1524, %v1656
  %v1658 = vand.u32 %v1657, 4294901760
  %v1659 = vsub.f32 %v1657, %v1658
  %v1660 = vand.u32 %v1659, 4294901760
  %1661 = vmatmul.f32.gmra.mxu0 %v1660
  %v1662 = vpop.f32.mrf.mxu0
  %v1663 = vadd.f32 %v1481, %v1662
  %v1664 = vand.u32 %v1527, 4294901760
  %v1665 = vsub.f32 %v1527, %v1664
  %v1666 = vand.u32 %v1665, 4294901760
  %v1667 = vsub.f32 %v1665, %v1666
  %v1668 = vand.u32 %v1667, 4294901760
  %1669 = vmatmul.f32.gmra.mxu0 %v1668
  %v1670 = vpop.f32.mrf.mxu0
  %v1671 = vadd.f32 %v1481, %v1670
  %v1672 = vand.u32 %v1530, 4294901760
  %v1673 = vsub.f32 %v1530, %v1672
  %v1674 = vand.u32 %v1673, 4294901760
  %v1675 = vsub.f32 %v1673, %v1674
  %v1676 = vand.u32 %v1675, 4294901760
  %1677 = vmatmul.f32.gmra.mxu0 %v1676
  %v1678 = vpop.f32.mrf.mxu0
  %v1679 = vadd.f32 %v1481, %v1678
  %1680 = vdwg.mxu0
  %1681 = vmatpush.xpose.msra.mxu0 0.0
  %1682 = vmatpush.xpose.msra.mxu0 0.0
  %1683 = vmatpush.xpose.msra.mxu0 0.0
  %1684 = vmatpush.xpose.msra.mxu0 0.0
  %1685 = vmatpush.xpose.msra.mxu0 0.0
  %1686 = vmatpush.xpose.msra.mxu0 0.0
  %1687 = vmatpush.xpose.msra.mxu0 0.0
  %1688 = vmatpush.xpose.msra.mxu0 0.0
  %1689 = vmatpush.xpose.msra.mxu0 0.0
  %1690 = vmatpush.xpose.msra.mxu0 0.0
  %1691 = vmatpush.xpose.msra.mxu0 0.0
  %1692 = vmatpush.xpose.msra.mxu0 0.0
  %1693 = vmatpush.xpose.msra.mxu0 0.0
  %1694 = vmatpush.xpose.msra.mxu0 0.0
  %1695 = vmatpush.xpose.msra.mxu0 0.0
  %v1696 = vand.u32 %v1533, 4294901760
  %v1697 = vsub.f32 %v1533, %v1696
  %v1698 = vand.u32 %v1697, 4294901760
  %v1699 = vsub.f32 %v1697, %v1698
  %v1700 = vand.u32 %v1699, 4294901760
  %1701 = vmatpush.xpose.msra.mxu0 %v1700
  %v1702 = vand.u32 %v1485, 4294901760
  %1703 = vmatmul.f32.gmra.mxu0 %v1702
  %v1704 = vpop.f32.mrf.mxu0
  %v1705 = vadd.f32 %v1559, %v1704
  %v1706 = vand.u32 %v1488, 4294901760
  %1707 = vmatmul.f32.gmra.mxu0 %v1706
  %v1708 = vpop.f32.mrf.mxu0
  %v1709 = vadd.f32 %v1567, %v1708
  %v1710 = vand.u32 %v1491, 4294901760
  %1711 = vmatmul.f32.gmra.mxu0 %v1710
  %v1712 = vpop.f32.mrf.mxu0
  %v1713 = vadd.f32 %v1575, %v1712
  %v1714 = vand.u32 %v1494, 4294901760
  %1715 = vmatmul.f32.gmra.mxu0 %v1714
  %v1716 = vpop.f32.mrf.mxu0
  %v1717 = vadd.f32 %v1583, %v1716
  %v1718 = vand.u32 %v1497, 4294901760
  %1719 = vmatmul.f32.gmra.mxu0 %v1718
  %v1720 = vpop.f32.mrf.mxu0
  %v1721 = vadd.f32 %v1591, %v1720
  %v1722 = vand.u32 %v1500, 4294901760
  %1723 = vmatmul.f32.gmra.mxu0 %v1722
  %v1724 = vpop.f32.mrf.mxu0
  %v1725 = vadd.f32 %v1599, %v1724
  %v1726 = vand.u32 %v1503, 4294901760
  %1727 = vmatmul.f32.gmra.mxu0 %v1726
  %v1728 = vpop.f32.mrf.mxu0
  %v1729 = vadd.f32 %v1607, %v1728
  %v1730 = vand.u32 %v1506, 4294901760
  %1731 = vmatmul.f32.gmra.mxu0 %v1730
  %v1732 = vpop.f32.mrf.mxu0
  %v1733 = vadd.f32 %v1615, %v1732
  %v1734 = vand.u32 %v1509, 4294901760
  %1735 = vmatmul.f32.gmra.mxu0 %v1734
  %v1736 = vpop.f32.mrf.mxu0
  %v1737 = vadd.f32 %v1623, %v1736
  %v1738 = vand.u32 %v1512, 4294901760
  %1739 = vmatmul.f32.gmra.mxu0 %v1738
  %v1740 = vpop.f32.mrf.mxu0
  %v1741 = vadd.f32 %v1631, %v1740
  %v1742 = vand.u32 %v1515, 4294901760
  %1743 = vmatmul.f32.gmra.mxu0 %v1742
  %v1744 = vpop.f32.mrf.mxu0
  %v1745 = vadd.f32 %v1639, %v1744
  %v1746 = vand.u32 %v1518, 4294901760
  %1747 = vmatmul.f32.gmra.mxu0 %v1746
  %v1748 = vpop.f32.mrf.mxu0
  %v1749 = vadd.f32 %v1647, %v1748
  %v1750 = vand.u32 %v1521, 4294901760
  %1751 = vmatmul.f32.gmra.mxu0 %v1750
  %v1752 = vpop.f32.mrf.mxu0
  %v1753 = vadd.f32 %v1655, %v1752
  %v1754 = vand.u32 %v1524, 4294901760
  %1755 = vmatmul.f32.gmra.mxu0 %v1754
  %v1756 = vpop.f32.mrf.mxu0
  %v1757 = vadd.f32 %v1663, %v1756
  %v1758 = vand.u32 %v1527, 4294901760
  %1759 = vmatmul.f32.gmra.mxu0 %v1758
  %v1760 = vpop.f32.mrf.mxu0
  %v1761 = vadd.f32 %v1671, %v1760
  %v1762 = vand.u32 %v1530, 4294901760
  %1763 = vmatmul.f32.gmra.mxu0 %v1762
  %v1764 = vpop.f32.mrf.mxu0
  %v1765 = vadd.f32 %v1679, %v1764
  %1766 = vdwg.mxu0
  %1767 = vmatpush.xpose.msra.mxu0 0.0
  %1768 = vmatpush.xpose.msra.mxu0 0.0
  %1769 = vmatpush.xpose.msra.mxu0 0.0
  %1770 = vmatpush.xpose.msra.mxu0 0.0
  %1771 = vmatpush.xpose.msra.mxu0 0.0
  %1772 = vmatpush.xpose.msra.mxu0 0.0
  %1773 = vmatpush.xpose.msra.mxu0 0.0
  %1774 = vmatpush.xpose.msra.mxu0 0.0
  %1775 = vmatpush.xpose.msra.mxu0 0.0
  %1776 = vmatpush.xpose.msra.mxu0 0.0
  %1777 = vmatpush.xpose.msra.mxu0 0.0
  %1778 = vmatpush.xpose.msra.mxu0 0.0
  %1779 = vmatpush.xpose.msra.mxu0 0.0
  %1780 = vmatpush.xpose.msra.mxu0 0.0
  %1781 = vmatpush.xpose.msra.mxu0 0.0
  %v1782 = vand.u32 %v1533, 4294901760
  %v1783 = vsub.f32 %v1533, %v1782
  %1784 = vmatpush.xpose.msra.mxu0 %v1783
  %v1785 = vand.u32 %v1485, 4294901760
  %v1786 = vsub.f32 %v1485, %v1785
  %1787 = vmatmul.f32.gmra.mxu0 %v1786
  %v1788 = vpop.f32.mrf.mxu0
  %v1789 = vadd.f32 %v1705, %v1788
  %v1790 = vand.u32 %v1488, 4294901760
  %v1791 = vsub.f32 %v1488, %v1790
  %1792 = vmatmul.f32.gmra.mxu0 %v1791
  %v1793 = vpop.f32.mrf.mxu0
  %v1794 = vadd.f32 %v1709, %v1793
  %v1795 = vand.u32 %v1491, 4294901760
  %v1796 = vsub.f32 %v1491, %v1795
  %1797 = vmatmul.f32.gmra.mxu0 %v1796
  %v1798 = vpop.f32.mrf.mxu0
  %v1799 = vadd.f32 %v1713, %v1798
  %v1800 = vand.u32 %v1494, 4294901760
  %v1801 = vsub.f32 %v1494, %v1800
  %1802 = vmatmul.f32.gmra.mxu0 %v1801
  %v1803 = vpop.f32.mrf.mxu0
  %v1804 = vadd.f32 %v1717, %v1803
  %v1805 = vand.u32 %v1497, 4294901760
  %v1806 = vsub.f32 %v1497, %v1805
  %1807 = vmatmul.f32.gmra.mxu0 %v1806
  %v1808 = vpop.f32.mrf.mxu0
  %v1809 = vadd.f32 %v1721, %v1808
  %v1810 = vand.u32 %v1500, 4294901760
  %v1811 = vsub.f32 %v1500, %v1810
  %1812 = vmatmul.f32.gmra.mxu0 %v1811
  %v1813 = vpop.f32.mrf.mxu0
  %v1814 = vadd.f32 %v1725, %v1813
  %v1815 = vand.u32 %v1503, 4294901760
  %v1816 = vsub.f32 %v1503, %v1815
  %1817 = vmatmul.f32.gmra.mxu0 %v1816
  %v1818 = vpop.f32.mrf.mxu0
  %v1819 = vadd.f32 %v1729, %v1818
  %v1820 = vand.u32 %v1506, 4294901760
  %v1821 = vsub.f32 %v1506, %v1820
  %1822 = vmatmul.f32.gmra.mxu0 %v1821
  %v1823 = vpop.f32.mrf.mxu0
  %v1824 = vadd.f32 %v1733, %v1823
  %v1825 = vand.u32 %v1509, 4294901760
  %v1826 = vsub.f32 %v1509, %v1825
  %1827 = vmatmul.f32.gmra.mxu0 %v1826
  %v1828 = vpop.f32.mrf.mxu0
  %v1829 = vadd.f32 %v1737, %v1828
  %v1830 = vand.u32 %v1512, 4294901760
  %v1831 = vsub.f32 %v1512, %v1830
  %1832 = vmatmul.f32.gmra.mxu0 %v1831
  %v1833 = vpop.f32.mrf.mxu0
  %v1834 = vadd.f32 %v1741, %v1833
  %v1835 = vand.u32 %v1515, 4294901760
  %v1836 = vsub.f32 %v1515, %v1835
  %1837 = vmatmul.f32.gmra.mxu0 %v1836
  %v1838 = vpop.f32.mrf.mxu0
  %v1839 = vadd.f32 %v1745, %v1838
  %v1840 = vand.u32 %v1518, 4294901760
  %v1841 = vsub.f32 %v1518, %v1840
  %1842 = vmatmul.f32.gmra.mxu0 %v1841
  %v1843 = vpop.f32.mrf.mxu0
  %v1844 = vadd.f32 %v1749, %v1843
  %v1845 = vand.u32 %v1521, 4294901760
  %v1846 = vsub.f32 %v1521, %v1845
  %1847 = vmatmul.f32.gmra.mxu0 %v1846
  %v1848 = vpop.f32.mrf.mxu0
  %v1849 = vadd.f32 %v1753, %v1848
  %v1850 = vand.u32 %v1524, 4294901760
  %v1851 = vsub.f32 %v1524, %v1850
  %1852 = vmatmul.f32.gmra.mxu0 %v1851
  %v1853 = vpop.f32.mrf.mxu0
  %v1854 = vadd.f32 %v1757, %v1853
  %v1855 = vand.u32 %v1527, 4294901760
  %v1856 = vsub.f32 %v1527, %v1855
  %1857 = vmatmul.f32.gmra.mxu0 %v1856
  %v1858 = vpop.f32.mrf.mxu0
  %v1859 = vadd.f32 %v1761, %v1858
  %v1860 = vand.u32 %v1530, 4294901760
  %v1861 = vsub.f32 %v1530, %v1860
  %1862 = vmatmul.f32.gmra.mxu0 %v1861
  %v1863 = vpop.f32.mrf.mxu0
  %v1864 = vadd.f32 %v1765, %v1863
  %1865 = vdwg.mxu0
  %1866 = vmatpush.xpose.msra.mxu0 0.0
  %1867 = vmatpush.xpose.msra.mxu0 0.0
  %1868 = vmatpush.xpose.msra.mxu0 0.0
  %1869 = vmatpush.xpose.msra.mxu0 0.0
  %1870 = vmatpush.xpose.msra.mxu0 0.0
  %1871 = vmatpush.xpose.msra.mxu0 0.0
  %1872 = vmatpush.xpose.msra.mxu0 0.0
  %1873 = vmatpush.xpose.msra.mxu0 0.0
  %1874 = vmatpush.xpose.msra.mxu0 0.0
  %1875 = vmatpush.xpose.msra.mxu0 0.0
  %1876 = vmatpush.xpose.msra.mxu0 0.0
  %1877 = vmatpush.xpose.msra.mxu0 0.0
  %1878 = vmatpush.xpose.msra.mxu0 0.0
  %1879 = vmatpush.xpose.msra.mxu0 0.0
  %1880 = vmatpush.xpose.msra.mxu0 0.0
  %v1881 = vand.u32 %v1533, 4294901760
  %1882 = vmatpush.xpose.msra.mxu0 %v1881
  %v1883 = vand.u32 %v1485, 4294901760
  %v1884 = vsub.f32 %v1485, %v1883
  %v1885 = vand.u32 %v1884, 4294901760
  %1886 = vmatmul.f32.gmra.mxu0 %v1885
  %v1887 = vpop.f32.mrf.mxu0
  %v1888 = vadd.f32 %v1789, %v1887
  %v1889 = vand.u32 %v1488, 4294901760
  %v1890 = vsub.f32 %v1488, %v1889
  %v1891 = vand.u32 %v1890, 4294901760
  %1892 = vmatmul.f32.gmra.mxu0 %v1891
  %v1893 = vpop.f32.mrf.mxu0
  %v1894 = vadd.f32 %v1794, %v1893
  %v1895 = vand.u32 %v1491, 4294901760
  %v1896 = vsub.f32 %v1491, %v1895
  %v1897 = vand.u32 %v1896, 4294901760
  %1898 = vmatmul.f32.gmra.mxu0 %v1897
  %v1899 = vpop.f32.mrf.mxu0
  %v1900 = vadd.f32 %v1799, %v1899
  %v1901 = vand.u32 %v1494, 4294901760
  %v1902 = vsub.f32 %v1494, %v1901
  %v1903 = vand.u32 %v1902, 4294901760
  %1904 = vmatmul.f32.gmra.mxu0 %v1903
  %v1905 = vpop.f32.mrf.mxu0
  %v1906 = vadd.f32 %v1804, %v1905
  %v1907 = vand.u32 %v1497, 4294901760
  %v1908 = vsub.f32 %v1497, %v1907
  %v1909 = vand.u32 %v1908, 4294901760
  %1910 = vmatmul.f32.gmra.mxu0 %v1909
  %v1911 = vpop.f32.mrf.mxu0
  %v1912 = vadd.f32 %v1809, %v1911
  %v1913 = vand.u32 %v1500, 4294901760
  %v1914 = vsub.f32 %v1500, %v1913
  %v1915 = vand.u32 %v1914, 4294901760
  %1916 = vmatmul.f32.gmra.mxu0 %v1915
  %v1917 = vpop.f32.mrf.mxu0
  %v1918 = vadd.f32 %v1814, %v1917
  %v1919 = vand.u32 %v1503, 4294901760
  %v1920 = vsub.f32 %v1503, %v1919
  %v1921 = vand.u32 %v1920, 4294901760
  %1922 = vmatmul.f32.gmra.mxu0 %v1921
  %v1923 = vpop.f32.mrf.mxu0
  %v1924 = vadd.f32 %v1819, %v1923
  %v1925 = vand.u32 %v1506, 4294901760
  %v1926 = vsub.f32 %v1506, %v1925
  %v1927 = vand.u32 %v1926, 4294901760
  %1928 = vmatmul.f32.gmra.mxu0 %v1927
  %v1929 = vpop.f32.mrf.mxu0
  %v1930 = vadd.f32 %v1824, %v1929
  %v1931 = vand.u32 %v1509, 4294901760
  %v1932 = vsub.f32 %v1509, %v1931
  %v1933 = vand.u32 %v1932, 4294901760
  %1934 = vmatmul.f32.gmra.mxu0 %v1933
  %v1935 = vpop.f32.mrf.mxu0
  %v1936 = vadd.f32 %v1829, %v1935
  %v1937 = vand.u32 %v1512, 4294901760
  %v1938 = vsub.f32 %v1512, %v1937
  %v1939 = vand.u32 %v1938, 4294901760
  %1940 = vmatmul.f32.gmra.mxu0 %v1939
  %v1941 = vpop.f32.mrf.mxu0
  %v1942 = vadd.f32 %v1834, %v1941
  %v1943 = vand.u32 %v1515, 4294901760
  %v1944 = vsub.f32 %v1515, %v1943
  %v1945 = vand.u32 %v1944, 4294901760
  %1946 = vmatmul.f32.gmra.mxu0 %v1945
  %v1947 = vpop.f32.mrf.mxu0
  %v1948 = vadd.f32 %v1839, %v1947
  %v1949 = vand.u32 %v1518, 4294901760
  %v1950 = vsub.f32 %v1518, %v1949
  %v1951 = vand.u32 %v1950, 4294901760
  %1952 = vmatmul.f32.gmra.mxu0 %v1951
  %v1953 = vpop.f32.mrf.mxu0
  %v1954 = vadd.f32 %v1844, %v1953
  %v1955 = vand.u32 %v1521, 4294901760
  %v1956 = vsub.f32 %v1521, %v1955
  %v1957 = vand.u32 %v1956, 4294901760
  %1958 = vmatmul.f32.gmra.mxu0 %v1957
  %v1959 = vpop.f32.mrf.mxu0
  %v1960 = vadd.f32 %v1849, %v1959
  %v1961 = vand.u32 %v1524, 4294901760
  %v1962 = vsub.f32 %v1524, %v1961
  %v1963 = vand.u32 %v1962, 4294901760
  %1964 = vmatmul.f32.gmra.mxu0 %v1963
  %v1965 = vpop.f32.mrf.mxu0
  %v1966 = vadd.f32 %v1854, %v1965
  %v1967 = vand.u32 %v1527, 4294901760
  %v1968 = vsub.f32 %v1527, %v1967
  %v1969 = vand.u32 %v1968, 4294901760
  %1970 = vmatmul.f32.gmra.mxu0 %v1969
  %v1971 = vpop.f32.mrf.mxu0
  %v1972 = vadd.f32 %v1859, %v1971
  %v1973 = vand.u32 %v1530, 4294901760
  %v1974 = vsub.f32 %v1530, %v1973
  %v1975 = vand.u32 %v1974, 4294901760
  %1976 = vmatmul.f32.gmra.mxu0 %v1975
  %v1977 = vpop.f32.mrf.mxu0
  %v1978 = vadd.f32 %v1864, %v1977
  %1979 = vdwg.mxu0
  %1980 = vmatpush.xpose.msra.mxu0 0.0
  %1981 = vmatpush.xpose.msra.mxu0 0.0
  %1982 = vmatpush.xpose.msra.mxu0 0.0
  %1983 = vmatpush.xpose.msra.mxu0 0.0
  %1984 = vmatpush.xpose.msra.mxu0 0.0
  %1985 = vmatpush.xpose.msra.mxu0 0.0
  %1986 = vmatpush.xpose.msra.mxu0 0.0
  %1987 = vmatpush.xpose.msra.mxu0 0.0
  %1988 = vmatpush.xpose.msra.mxu0 0.0
  %1989 = vmatpush.xpose.msra.mxu0 0.0
  %1990 = vmatpush.xpose.msra.mxu0 0.0
  %1991 = vmatpush.xpose.msra.mxu0 0.0
  %1992 = vmatpush.xpose.msra.mxu0 0.0
  %1993 = vmatpush.xpose.msra.mxu0 0.0
  %1994 = vmatpush.xpose.msra.mxu0 0.0
  %v1995 = vand.u32 %v1533, 4294901760
  %v1996 = vsub.f32 %v1533, %v1995
  %v1997 = vand.u32 %v1996, 4294901760
  %1998 = vmatpush.xpose.msra.mxu0 %v1997
  %v1999 = vand.u32 %v1485, 4294901760
  %2000 = vmatmul.f32.gmra.mxu0 %v1999
  %v2001 = vpop.f32.mrf.mxu0
  %v2002 = vadd.f32 %v1888, %v2001
  %v2003 = vand.u32 %v1488, 4294901760
  %2004 = vmatmul.f32.gmra.mxu0 %v2003
  %v2005 = vpop.f32.mrf.mxu0
  %v2006 = vadd.f32 %v1894, %v2005
  %v2007 = vand.u32 %v1491, 4294901760
  %2008 = vmatmul.f32.gmra.mxu0 %v2007
  %v2009 = vpop.f32.mrf.mxu0
  %v2010 = vadd.f32 %v1900, %v2009
  %v2011 = vand.u32 %v1494, 4294901760
  %2012 = vmatmul.f32.gmra.mxu0 %v2011
  %v2013 = vpop.f32.mrf.mxu0
  %v2014 = vadd.f32 %v1906, %v2013
  %v2015 = vand.u32 %v1497, 4294901760
  %2016 = vmatmul.f32.gmra.mxu0 %v2015
  %v2017 = vpop.f32.mrf.mxu0
  %v2018 = vadd.f32 %v1912, %v2017
  %v2019 = vand.u32 %v1500, 4294901760
  %2020 = vmatmul.f32.gmra.mxu0 %v2019
  %v2021 = vpop.f32.mrf.mxu0
  %v2022 = vadd.f32 %v1918, %v2021
  %v2023 = vand.u32 %v1503, 4294901760
  %2024 = vmatmul.f32.gmra.mxu0 %v2023
  %v2025 = vpop.f32.mrf.mxu0
  %v2026 = vadd.f32 %v1924, %v2025
  %v2027 = vand.u32 %v1506, 4294901760
  %2028 = vmatmul.f32.gmra.mxu0 %v2027
  %v2029 = vpop.f32.mrf.mxu0
  %v2030 = vadd.f32 %v1930, %v2029
  %v2031 = vand.u32 %v1509, 4294901760
  %2032 = vmatmul.f32.gmra.mxu0 %v2031
  %v2033 = vpop.f32.mrf.mxu0
  %v2034 = vadd.f32 %v1936, %v2033
  %v2035 = vand.u32 %v1512, 4294901760
  %2036 = vmatmul.f32.gmra.mxu0 %v2035
  %v2037 = vpop.f32.mrf.mxu0
  %v2038 = vadd.f32 %v1942, %v2037
  %v2039 = vand.u32 %v1515, 4294901760
  %2040 = vmatmul.f32.gmra.mxu0 %v2039
  %v2041 = vpop.f32.mrf.mxu0
  %v2042 = vadd.f32 %v1948, %v2041
  %v2043 = vand.u32 %v1518, 4294901760
  %2044 = vmatmul.f32.gmra.mxu0 %v2043
  %v2045 = vpop.f32.mrf.mxu0
  %v2046 = vadd.f32 %v1954, %v2045
  %v2047 = vand.u32 %v1521, 4294901760
  %2048 = vmatmul.f32.gmra.mxu0 %v2047
  %v2049 = vpop.f32.mrf.mxu0
  %v2050 = vadd.f32 %v1960, %v2049
  %v2051 = vand.u32 %v1524, 4294901760
  %2052 = vmatmul.f32.gmra.mxu0 %v2051
  %v2053 = vpop.f32.mrf.mxu0
  %v2054 = vadd.f32 %v1966, %v2053
  %v2055 = vand.u32 %v1527, 4294901760
  %2056 = vmatmul.f32.gmra.mxu0 %v2055
  %v2057 = vpop.f32.mrf.mxu0
  %v2058 = vadd.f32 %v1972, %v2057
  %v2059 = vand.u32 %v1530, 4294901760
  %2060 = vmatmul.f32.gmra.mxu0 %v2059
  %v2061 = vpop.f32.mrf.mxu0
  %v2062 = vadd.f32 %v1978, %v2061
  %2063 = vdwg.mxu0
  %2064 = vmatpush.xpose.msra.mxu0 0.0
  %2065 = vmatpush.xpose.msra.mxu0 0.0
  %2066 = vmatpush.xpose.msra.mxu0 0.0
  %2067 = vmatpush.xpose.msra.mxu0 0.0
  %2068 = vmatpush.xpose.msra.mxu0 0.0
  %2069 = vmatpush.xpose.msra.mxu0 0.0
  %2070 = vmatpush.xpose.msra.mxu0 0.0
  %2071 = vmatpush.xpose.msra.mxu0 0.0
  %2072 = vmatpush.xpose.msra.mxu0 0.0
  %2073 = vmatpush.xpose.msra.mxu0 0.0
  %2074 = vmatpush.xpose.msra.mxu0 0.0
  %2075 = vmatpush.xpose.msra.mxu0 0.0
  %2076 = vmatpush.xpose.msra.mxu0 0.0
  %2077 = vmatpush.xpose.msra.mxu0 0.0
  %2078 = vmatpush.xpose.msra.mxu0 0.0
  %v2079 = vand.u32 %v1533, 4294901760
  %2080 = vmatpush.xpose.msra.mxu0 %v2079
  %v2081 = vand.u32 %v1485, 4294901760
  %2082 = vmatmul.f32.gmra.mxu0 %v2081
  %v2083 = vpop.f32.mrf.mxu0
  %v2084 = vadd.f32 %v2002, %v2083
  %v2085 = vand.u32 %v1488, 4294901760
  %2086 = vmatmul.f32.gmra.mxu0 %v2085
  %v2087 = vpop.f32.mrf.mxu0
  %v2088 = vadd.f32 %v2006, %v2087
  %v2089 = vand.u32 %v1491, 4294901760
  %2090 = vmatmul.f32.gmra.mxu0 %v2089
  %v2091 = vpop.f32.mrf.mxu0
  %v2092 = vadd.f32 %v2010, %v2091
  %v2093 = vand.u32 %v1494, 4294901760
  %2094 = vmatmul.f32.gmra.mxu0 %v2093
  %v2095 = vpop.f32.mrf.mxu0
  %v2096 = vadd.f32 %v2014, %v2095
  %v2097 = vand.u32 %v1497, 4294901760
  %2098 = vmatmul.f32.gmra.mxu0 %v2097
  %v2099 = vpop.f32.mrf.mxu0
  %v2100 = vadd.f32 %v2018, %v2099
  %v2101 = vand.u32 %v1500, 4294901760
  %2102 = vmatmul.f32.gmra.mxu0 %v2101
  %v2103 = vpop.f32.mrf.mxu0
  %v2104 = vadd.f32 %v2022, %v2103
  %v2105 = vand.u32 %v1503, 4294901760
  %2106 = vmatmul.f32.gmra.mxu0 %v2105
  %v2107 = vpop.f32.mrf.mxu0
  %v2108 = vadd.f32 %v2026, %v2107
  %v2109 = vand.u32 %v1506, 4294901760
  %2110 = vmatmul.f32.gmra.mxu0 %v2109
  %v2111 = vpop.f32.mrf.mxu0
  %v2112 = vadd.f32 %v2030, %v2111
  %v2113 = vand.u32 %v1509, 4294901760
  %2114 = vmatmul.f32.gmra.mxu0 %v2113
  %v2115 = vpop.f32.mrf.mxu0
  %v2116 = vadd.f32 %v2034, %v2115
  %v2117 = vand.u32 %v1512, 4294901760
  %2118 = vmatmul.f32.gmra.mxu0 %v2117
  %v2119 = vpop.f32.mrf.mxu0
  %v2120 = vadd.f32 %v2038, %v2119
  %v2121 = vand.u32 %v1515, 4294901760
  %2122 = vmatmul.f32.gmra.mxu0 %v2121
  %v2123 = vpop.f32.mrf.mxu0
  %v2124 = vadd.f32 %v2042, %v2123
  %v2125 = vand.u32 %v1518, 4294901760
  %2126 = vmatmul.f32.gmra.mxu0 %v2125
  %v2127 = vpop.f32.mrf.mxu0
  %v2128 = vadd.f32 %v2046, %v2127
  %v2129 = vand.u32 %v1521, 4294901760
  %2130 = vmatmul.f32.gmra.mxu0 %v2129
  %v2131 = vpop.f32.mrf.mxu0
  %v2132 = vadd.f32 %v2050, %v2131
  %v2133 = vand.u32 %v1524, 4294901760
  %2134 = vmatmul.f32.gmra.mxu0 %v2133
  %v2135 = vpop.f32.mrf.mxu0
  %v2136 = vadd.f32 %v2054, %v2135
  %v2137 = vand.u32 %v1527, 4294901760
  %2138 = vmatmul.f32.gmra.mxu0 %v2137
  %v2139 = vpop.f32.mrf.mxu0
  %v2140 = vadd.f32 %v2058, %v2139
  %v2141 = vand.u32 %v1530, 4294901760
  %2142 = vmatmul.f32.gmra.mxu0 %v2141
  %v2143 = vpop.f32.mrf.mxu0
  %v2144 = vadd.f32 %v2062, %v2143
  %2145 = vdwg.mxu0
  %vm2146 = vcmask 31744
  %2147 = vst.msk [vmem:[%s7] sm:$0xff] %vm2146, %v2084
  %2148 = vst.msk [vmem:[%s7 + $0x8] sm:$0xff] %vm2146, %v2088
  %2149 = vst.msk [vmem:[%s7 + $0x10] sm:$0xff] %vm2146, %v2092
  %2150 = vst.msk [vmem:[%s7 + $0x18] sm:$0xff] %vm2146, %v2096
  %2151 = vst.msk [vmem:[%s7 + $0x20] sm:$0xff] %vm2146, %v2100
  %2152 = vst.msk [vmem:[%s7 + $0x28] sm:$0xff] %vm2146, %v2104
  %2153 = vst.msk [vmem:[%s7 + $0x30] sm:$0xff] %vm2146, %v2108
  %2154 = vst.msk [vmem:[%s7 + $0x38] sm:$0xff] %vm2146, %v2112
  %2155 = vst.msk [vmem:[%s7 + $0x40] sm:$0xff] %vm2146, %v2116
  %2156 = vst.msk [vmem:[%s7 + $0x48] sm:$0xff] %vm2146, %v2120
  %2157 = vst.msk [vmem:[%s7 + $0x50] sm:$0xff] %vm2146, %v2124
  %2158 = vst.msk [vmem:[%s7 + $0x58] sm:$0xff] %vm2146, %v2128
  %2159 = vst.msk [vmem:[%s7 + $0x60] sm:$0xff] %vm2146, %v2132
  %2160 = vst.msk [vmem:[%s7 + $0x68] sm:$0xff] %vm2146, %v2136
  %2161 = vst.msk [vmem:[%s7 + $0x70] sm:$0xff] %vm2146, %v2140
  %2162 = vst.msk [vmem:[%s7 + $0x78] sm:$0xff] %vm2146, %v2144
  // Predicated region
  $region30: #{tpu_custom_call.1} parent=0 // pred_check
    _
  $region31: #{tpu_custom_call.1} parent=0 // pred_check_branch
    %2164 = sbr.rel (0) target = $region33
  $region32: #{tpu_custom_call.1} parent=0 // pred_region
    _
  $region33: #{tpu_custom_call.1} parent=0 // pred_fallthru
    _
  // Predicated region
  $region34: #{tpu_custom_call.1} parent=0 // pred_check
    _
  $region35: #{tpu_custom_call.1} parent=0 // pred_check_branch
    %2166 = sbr.rel (0) target = $region37
  $region36: #{tpu_custom_call.1} parent=0 // pred_region
    _
  $region37: #{tpu_custom_call.1} parent=0 // pred_fallthru
    _

</llo_original>
